<compile_context>
chip_gen: v6e
topology: v6e:2x2x1
jax: 0.10.0
libtpu: 0.0.40
codegen_flags: <defaults>
</compile_context>

<pallas_src>
import jax
import jax.numpy as jnp
from jax.experimental import pallas as pl
from jax.experimental.pallas import tpu as pltpu


def head_kernel(seq_ref, mask_ref, scalars_ref,
                w_att_ref, vecs_ref, w_dense_ref, w_cls_ref, b_cls_ref,
                out_ref, fused_sc):
    bt, s_len, hidden = seq_ref.shape

    # bf16 stream -> f32 math.
    seq = seq_ref[...].astype(jnp.float32)                    # [Bt, S, H]
    mask = mask_ref[...]                                      # [Bt, 1, S]
    b_att = scalars_ref[0]                                    # SMEM scalar
    scale = scalars_ref[1]                                    # SMEM scalar

    # --- attention scores, lane-dense over S: [Bt, 1, S] (MXU) -------------
    w_row = jnp.broadcast_to(w_att_ref[...], (bt, 1, hidden))       # [Bt,1,H]
    scores = jnp.einsum("bkh,bsh->bks", w_row, seq,
                        preferred_element_type=jnp.float32)         # [Bt,1,S]
    scores = (scores + b_att) * scale
    scores = jnp.where(mask == 0.0, jnp.float32(-1e9), scores)

    # --- softmax along the lane (sequence) axis -----------------------------
    m = jnp.max(scores, axis=-1, keepdims=True)
    e = jnp.exp(scores - m)
    denom = jnp.sum(e, axis=-1, keepdims=True)
    p = e * pl.reciprocal(denom, approx=True)                 # EUP reciprocal

    # --- weighted pooling on the MXU + CLS-token fusion ---------------------
    weighted = jnp.einsum("bks,bsh->bkh", p, seq,
                          preferred_element_type=jnp.float32)       # [Bt,1,H]
    fused3 = weighted + seq[:, 0:1, :]                              # [Bt,1,H]

    # Pack the Bt (1, H) rows into a sublane-dense [Bt, H] tile so the MLP
    # matmuls run with M=Bt (Bt cheap masked sublane stores into VMEM scratch;
    # avoids relying on a 3-D -> 2-D relayout/reshape inside Mosaic).
    for b in range(bt):
        fused_sc[pl.ds(b, 1), :] = fused3[b]
    fused = fused_sc[...]                                           # [Bt, H]

    # --- LayerNorm over H (eps = 1e-5, biased variance) ---------------------
    mu = jnp.mean(fused, axis=-1, keepdims=True)
    var = jnp.mean((fused - mu) ** 2, axis=-1, keepdims=True)
    normed = (fused - mu) * jax.lax.rsqrt(var + 1e-5)
    normed = normed * vecs_ref[0:1, :] + vecs_ref[1:2, :]           # gamma/beta

    # --- dropout1 (identity) -> dense -> exact GELU -> dropout2 -> classifier
    h = jnp.dot(normed, w_dense_ref[...],
                preferred_element_type=jnp.float32) + vecs_ref[2:3, :]
    h = 0.5 * h * (1.0 + jax.lax.erf(h * jnp.float32(0.7071067811865476)))
    out_ref[...] = jnp.dot(h, w_cls_ref[...],
                           preferred_element_type=jnp.float32) + b_cls_ref[...]


def _pick_batch_tile(B, S, H, target=8, vmem_budget_bytes=16 * 1024 * 1024):
    # Cap the batch tile so double-buffered bf16 activations stay well inside
    # the scoped-VMEM budget (important at RoBERTa scale and on v7x's 64 MiB).
    bt = min(B, target)
    while bt > 1 and (B % bt != 0 or 2 * bt * S * H * 2 > vmem_budget_bytes):
        bt -= 1
    return bt


def light_attention_head(seq, mask, params, *, batch_tile=8):
    """seq: [B,S,H] f32 last_hidden_state, mask: [B,S] f32 (1 keep / 0 pad)."""
    B, S, H = seq.shape
    C = params["w_cls"].shape[1]
    bt = _pick_batch_tile(B, S, H, target=batch_tile)

    # Lane-dense classifier output: pad C up to a multiple of 128, slice after.
    Cp = ((C + 127) // 128) * 128
    w_cls_p = jnp.zeros((H, Cp), jnp.float32).at[:, :C].set(params["w_cls"])
    b_cls_p = jnp.zeros((1, Cp), jnp.float32).at[0, :C].set(params["b_cls"])

    # Stream the big activation tensor as bf16 (halves HBM bytes / VMEM).
    seq_bf16 = seq.astype(jnp.bfloat16)
    mask3 = mask.reshape(B, 1, S).astype(jnp.float32)

    scalars = jnp.concatenate(
        [params["b_att"].reshape(1), params["scale"].reshape(1)]).astype(jnp.float32)
    vecs = jnp.stack(
        [params["ln_g"], params["ln_b"], params["b_dense"]]).astype(jnp.float32)

    const2d = lambda i: (0, 0)   # constant index -> weights stay VMEM-resident

    out = pl.pallas_call(
        head_kernel,
        out_shape=jax.ShapeDtypeStruct((B, Cp), jnp.float32),
        grid_spec=pltpu.PrefetchScalarGridSpec(
            num_scalar_prefetch=0,
            grid=(B // bt,),
            in_specs=[
                pl.BlockSpec((bt, S, H), lambda i: (i, 0, 0)),        # seq (bf16)
                pl.BlockSpec((bt, 1, S), lambda i: (i, 0, 0)),        # mask
                pl.BlockSpec(memory_space=pltpu.MemorySpace.SMEM),    # b_att, scale
                pl.BlockSpec((1, H), const2d),                        # attention weight
                pl.BlockSpec((3, H), const2d),                        # ln_g/ln_b/b_dense
                pl.BlockSpec((H, H), const2d),                        # dense weight
                pl.BlockSpec((H, Cp), const2d),                       # classifier W (padded)
                pl.BlockSpec((1, Cp), const2d),                       # classifier b (padded)
            ],
            out_specs=pl.BlockSpec((bt, Cp), lambda i: (i, 0)),
            scratch_shapes=[pltpu.VMEM((bt, H), jnp.float32)],
        ),
        compiler_params=pltpu.CompilerParams(
            dimension_semantics=("parallel",),
            vmem_limit_bytes=32 * 1024 * 1024),
    )(seq_bf16, mask3, scalars,
      params["w_att"], vecs, params["w_dense"], w_cls_p, b_cls_p)

    return out[:, :C]


def reference_head(seq, mask, params):
    """Plain-JAX reference (uses the same bf16-rounded activations)."""
    hi = jax.lax.Precision.HIGHEST
    seqq = seq.astype(jnp.bfloat16).astype(jnp.float32)
    scores = jnp.einsum("bsh,h->bs", seqq, params["w_att"][0], precision=hi)
    scores = (scores + params["b_att"][0]) * params["scale"][0]
    scores = jnp.where(mask == 0.0, jnp.float32(-1e9), scores)
    p = jax.nn.softmax(scores, axis=1)
    weighted = jnp.einsum("bs,bsh->bh", p, seqq, precision=hi)
    fused = weighted + seqq[:, 0, :]
    mu = jnp.mean(fused, axis=-1, keepdims=True)
    var = jnp.mean((fused - mu) ** 2, axis=-1, keepdims=True)
    normed = (fused - mu) / jnp.sqrt(var + 1e-5)
    normed = normed * params["ln_g"] + params["ln_b"]
    h = jnp.dot(normed, params["w_dense"], precision=hi) + params["b_dense"]
    h = 0.5 * h * (1.0 + jax.lax.erf(h * jnp.float32(0.7071067811865476)))
    return jnp.dot(h, params["w_cls"], precision=hi) + params["b_cls"]


if __name__ == "__main__":
    B, S, H, C = 16, 16, 32, 4   # batch, seq_len, hidden_size, num_classes

    key = jax.random.PRNGKey(0)
    ks = jax.random.split(key, 9)

    # "last_hidden_state" stand-in for the roberta output.
    seq = jax.random.normal(ks[0], (B, S, H), dtype=jnp.float32)

    # attention mask: variable valid lengths in [1, S].
    lengths = jax.random.randint(ks[1], (B,), 1, S + 1)
    mask = (jnp.arange(S)[None, :] < lengths[:, None]).astype(jnp.float32)

    params = {
        "w_att":   jax.random.normal(ks[2], (1, H), dtype=jnp.float32) * 0.05,
        "b_att":   jax.random.normal(ks[3], (1,), dtype=jnp.float32) * 0.02,
        "scale":   jnp.full((1,), 0.9, dtype=jnp.float32),
        "ln_g":    1.0 + 0.1 * jax.random.normal(ks[4], (H,), dtype=jnp.float32),
        "ln_b":    0.01 * jax.random.normal(ks[5], (H,), dtype=jnp.float32),
        "w_dense": jax.random.normal(ks[6], (H, H), dtype=jnp.float32) * 0.05,
        "b_dense": jax.random.normal(ks[7], (H,), dtype=jnp.float32) * 0.01,
        "w_cls":   jax.random.normal(ks[8], (H, C), dtype=jnp.float32) * 0.05,
        "b_cls":   jnp.zeros((C,), dtype=jnp.float32),
    }

    logits = light_attention_head(seq, mask, params)
    logits = jax.block_until_ready(logits)

    ref = reference_head(seq, mask, params)
    assert logits.shape == (B, C), logits.shape
    max_err = float(jnp.max(jnp.abs(logits - ref)))
    assert jnp.allclose(logits, ref, atol=2e-3, rtol=2e-3), (max_err, logits, ref)

    print("KERNEL_OK")
</pallas_src>

<mosaic_0001>
module attributes {stable_mosaic.version = 11 : i64} {
  func.func @head_kernel(%arg0: i32, %arg1: memref<8x16x32xbf16, #tpu.memory_space<vmem>>, %arg2: memref<8x1x16xf32, #tpu.memory_space<vmem>>, %arg3: memref<2xf32, #tpu.memory_space<smem>>, %arg4: memref<1x32xf32, #tpu.memory_space<vmem>>, %arg5: memref<3x32xf32, #tpu.memory_space<vmem>>, %arg6: memref<32x32xf32, #tpu.memory_space<vmem>>, %arg7: memref<32x128xf32, #tpu.memory_space<vmem>>, %arg8: memref<1x128xf32, #tpu.memory_space<vmem>>, %arg9: memref<8x128xf32, #tpu.memory_space<vmem>>, %arg10: memref<8x32xf32, #tpu.memory_space<vmem>>) attributes {dimension_semantics = [#tpu.dimension_semantics<parallel>], iteration_bounds = array<i64: 2>, scalar_prefetch = 0 : i64, scratch_operands = 1 : i64, tpu.core_type = #tpu.core_type<tc>, window_params = [{transform_indices = @transform_0, window_bounds = array<i64: 8, 16, 32>}, {transform_indices = @transform_1, window_bounds = array<i64: 8, 1, 16>}, {transform_indices = @transform_2, window_bounds = array<i64: 2>}, {pipeline_mode = #tpu.pipeline_mode<synchronous>, transform_indices = @transform_3, window_bounds = array<i64: 1, 32>}, {pipeline_mode = #tpu.pipeline_mode<synchronous>, transform_indices = @transform_4, window_bounds = array<i64: 3, 32>}, {pipeline_mode = #tpu.pipeline_mode<synchronous>, transform_indices = @transform_5, window_bounds = array<i64: 32, 32>}, {pipeline_mode = #tpu.pipeline_mode<synchronous>, transform_indices = @transform_6, window_bounds = array<i64: 32, 128>}, {pipeline_mode = #tpu.pipeline_mode<synchronous>, transform_indices = @transform_7, window_bounds = array<i64: 1, 128>}, {transform_indices = @transform_8, window_bounds = array<i64: 8, 128>}]} {
    %c0 = arith.constant 0 : index
    %c0_0 = arith.constant 0 : index
    %c0_1 = arith.constant 0 : index
    %0 = vector.load %arg1[%c0, %c0_0, %c0_1] : memref<8x16x32xbf16, #tpu.memory_space<vmem>>, vector<8x16x32xbf16>
    %1 = arith.extf %0 : vector<8x16x32xbf16> to vector<8x16x32xf32>
    %c0_2 = arith.constant 0 : index
    %c0_3 = arith.constant 0 : index
    %c0_4 = arith.constant 0 : index
    %2 = vector.load %arg2[%c0_2, %c0_3, %c0_4] : memref<8x1x16xf32, #tpu.memory_space<vmem>>, vector<8x1x16xf32>
    %c0_5 = arith.constant 0 : index
    %3 = memref.load %arg3[%c0_5] : memref<2xf32, #tpu.memory_space<smem>>
    %c1 = arith.constant 1 : index
    %4 = memref.load %arg3[%c1] : memref<2xf32, #tpu.memory_space<smem>>
    %c0_6 = arith.constant 0 : index
    %c0_7 = arith.constant 0 : index
    %5 = vector.load %arg4[%c0_6, %c0_7] : memref<1x32xf32, #tpu.memory_space<vmem>>, vector<1x32xf32>
    %6 = vector.shape_cast %5 : vector<1x32xf32> to vector<1x1x32xf32>
    %7 = vector.broadcast %6 : vector<1x1x32xf32> to vector<8x1x32xf32>
    "tpu.trace_start"() <{level = 10 : i32, message = "bkh,bsh->bks"}> : () -> ()
    %cst = arith.constant dense<0.000000e+00> : vector<8x1x16xf32>
    %8 = tpu.matmul %7, %1, %cst {dimension_numbers = #tpu.dot_dimension_numbers<[2], [2], [1], [1], [0, 0, 0, 1, 1, 1], [0], [0]>} : vector<8x1x32xf32>, vector<8x16x32xf32>, vector<8x1x16xf32> -> vector<8x1x16xf32>
    "tpu.trace_stop"() : () -> ()
    %9 = vector.broadcast %3 : f32 to vector<8x1x16xf32>
    %10 = arith.addf %8, %9 : vector<8x1x16xf32>
    %11 = vector.broadcast %4 : f32 to vector<8x1x16xf32>
    %12 = arith.mulf %10, %11 : vector<8x1x16xf32>
    %cst_8 = arith.constant 0.000000e+00 : f32
    %13 = vector.broadcast %cst_8 : f32 to vector<8x1x16xf32>
    %14 = arith.cmpf oeq, %2, %13 : vector<8x1x16xf32>
    %cst_9 = arith.constant -1.000000e+09 : f32
    %15 = vector.broadcast %cst_9 : f32 to vector<8x1x16xf32>
    %16 = arith.select %14, %15, %12 : vector<8x1x16xi1>, vector<8x1x16xf32>
    %cst_10 = arith.constant dense<0xFF800000> : vector<8x1xf32>
    %17 = vector.multi_reduction <maximumf>, %16, %cst_10 [2] : vector<8x1x16xf32> to vector<8x1xf32>
    %18 = vector.shape_cast %17 : vector<8x1xf32> to vector<8x1x1xf32>
    %19 = vector.broadcast %18 : vector<8x1x1xf32> to vector<8x1x16xf32>
    %20 = arith.subf %16, %19 : vector<8x1x16xf32>
    %21 = math.exp %20 : vector<8x1x16xf32>
    %cst_11 = arith.constant dense<0.000000e+00> : vector<8x1xf32>
    %22 = vector.multi_reduction <add>, %21, %cst_11 [2] : vector<8x1x16xf32> to vector<8x1xf32>
    %23 = vector.shape_cast %22 : vector<8x1xf32> to vector<8x1x1xf32>
    %24 = tpu.reciprocal %23 {approx = true} : vector<8x1x1xf32> -> vector<8x1x1xf32>
    %25 = vector.broadcast %24 : vector<8x1x1xf32> to vector<8x1x16xf32>
    %26 = arith.mulf %21, %25 : vector<8x1x16xf32>
    "tpu.trace_start"() <{level = 10 : i32, message = "bks,bsh->bkh"}> : () -> ()
    %cst_12 = arith.constant dense<0.000000e+00> : vector<8x1x32xf32>
    %27 = tpu.matmul %26, %1, %cst_12 {dimension_numbers = #tpu.dot_dimension_numbers<[2], [1], [1], [2], [0, 0, 0, 1, 1, 2], [0], [0]>} : vector<8x1x16xf32>, vector<8x16x32xf32>, vector<8x1x32xf32> -> vector<8x1x32xf32>
    "tpu.trace_stop"() : () -> ()
    %28 = vector.extract_strided_slice %1 {offsets = [0, 0, 0], sizes = [8, 1, 32], strides = [1, 1, 1]} : vector<8x16x32xf32> to vector<8x1x32xf32>
    %29 = arith.addf %27, %28 : vector<8x1x32xf32>
    %30 = vector.extract_strided_slice %29 {offsets = [0, 0, 0], sizes = [1, 1, 32], strides = [1, 1, 1]} : vector<8x1x32xf32> to vector<1x1x32xf32>
    %31 = vector.shape_cast %30 : vector<1x1x32xf32> to vector<1x32xf32>
    %c0_13 = arith.constant 0 : index
    %c0_14 = arith.constant 0 : index
    %32 = vector.load %arg10[%c0_13, %c0_14] : memref<8x32xf32, #tpu.memory_space<vmem>>, vector<1x32xf32>
    tpu.vector_store %arg10[%c0_13, %c0_14], %31 {strides = array<i32>} : memref<8x32xf32, #tpu.memory_space<vmem>>, vector<1x32xf32>,
    %33 = vector.extract_strided_slice %29 {offsets = [1, 0, 0], sizes = [1, 1, 32], strides = [1, 1, 1]} : vector<8x1x32xf32> to vector<1x1x32xf32>
    %34 = vector.shape_cast %33 : vector<1x1x32xf32> to vector<1x32xf32>
    %c1_15 = arith.constant 1 : index
    %c0_16 = arith.constant 0 : index
    %35 = vector.load %arg10[%c1_15, %c0_16] : memref<8x32xf32, #tpu.memory_space<vmem>>, vector<1x32xf32>
    tpu.vector_store %arg10[%c1_15, %c0_16], %34 {strides = array<i32>} : memref<8x32xf32, #tpu.memory_space<vmem>>, vector<1x32xf32>,
    %36 = vector.extract_strided_slice %29 {offsets = [2, 0, 0], sizes = [1, 1, 32], strides = [1, 1, 1]} : vector<8x1x32xf32> to vector<1x1x32xf32>
    %37 = vector.shape_cast %36 : vector<1x1x32xf32> to vector<1x32xf32>
    %c2 = arith.constant 2 : index
    %c0_17 = arith.constant 0 : index
    %38 = vector.load %arg10[%c2, %c0_17] : memref<8x32xf32, #tpu.memory_space<vmem>>, vector<1x32xf32>
    tpu.vector_store %arg10[%c2, %c0_17], %37 {strides = array<i32>} : memref<8x32xf32, #tpu.memory_space<vmem>>, vector<1x32xf32>,
    %39 = vector.extract_strided_slice %29 {offsets = [3, 0, 0], sizes = [1, 1, 32], strides = [1, 1, 1]} : vector<8x1x32xf32> to vector<1x1x32xf32>
    %40 = vector.shape_cast %39 : vector<1x1x32xf32> to vector<1x32xf32>
    %c3 = arith.constant 3 : index
    %c0_18 = arith.constant 0 : index
    %41 = vector.load %arg10[%c3, %c0_18] : memref<8x32xf32, #tpu.memory_space<vmem>>, vector<1x32xf32>
    tpu.vector_store %arg10[%c3, %c0_18], %40 {strides = array<i32>} : memref<8x32xf32, #tpu.memory_space<vmem>>, vector<1x32xf32>,
    %42 = vector.extract_strided_slice %29 {offsets = [4, 0, 0], sizes = [1, 1, 32], strides = [1, 1, 1]} : vector<8x1x32xf32> to vector<1x1x32xf32>
    %43 = vector.shape_cast %42 : vector<1x1x32xf32> to vector<1x32xf32>
    %c4 = arith.constant 4 : index
    %c0_19 = arith.constant 0 : index
    %44 = vector.load %arg10[%c4, %c0_19] : memref<8x32xf32, #tpu.memory_space<vmem>>, vector<1x32xf32>
    tpu.vector_store %arg10[%c4, %c0_19], %43 {strides = array<i32>} : memref<8x32xf32, #tpu.memory_space<vmem>>, vector<1x32xf32>,
    %45 = vector.extract_strided_slice %29 {offsets = [5, 0, 0], sizes = [1, 1, 32], strides = [1, 1, 1]} : vector<8x1x32xf32> to vector<1x1x32xf32>
    %46 = vector.shape_cast %45 : vector<1x1x32xf32> to vector<1x32xf32>
    %c5 = arith.constant 5 : index
    %c0_20 = arith.constant 0 : index
    %47 = vector.load %arg10[%c5, %c0_20] : memref<8x32xf32, #tpu.memory_space<vmem>>, vector<1x32xf32>
    tpu.vector_store %arg10[%c5, %c0_20], %46 {strides = array<i32>} : memref<8x32xf32, #tpu.memory_space<vmem>>, vector<1x32xf32>,
    %48 = vector.extract_strided_slice %29 {offsets = [6, 0, 0], sizes = [1, 1, 32], strides = [1, 1, 1]} : vector<8x1x32xf32> to vector<1x1x32xf32>
    %49 = vector.shape_cast %48 : vector<1x1x32xf32> to vector<1x32xf32>
    %c6 = arith.constant 6 : index
    %c0_21 = arith.constant 0 : index
    %50 = vector.load %arg10[%c6, %c0_21] : memref<8x32xf32, #tpu.memory_space<vmem>>, vector<1x32xf32>
    tpu.vector_store %arg10[%c6, %c0_21], %49 {strides = array<i32>} : memref<8x32xf32, #tpu.memory_space<vmem>>, vector<1x32xf32>,
    %51 = vector.extract_strided_slice %29 {offsets = [7, 0, 0], sizes = [1, 1, 32], strides = [1, 1, 1]} : vector<8x1x32xf32> to vector<1x1x32xf32>
    %52 = vector.shape_cast %51 : vector<1x1x32xf32> to vector<1x32xf32>
    %c7 = arith.constant 7 : index
    %c0_22 = arith.constant 0 : index
    %53 = vector.load %arg10[%c7, %c0_22] : memref<8x32xf32, #tpu.memory_space<vmem>>, vector<1x32xf32>
    tpu.vector_store %arg10[%c7, %c0_22], %52 {strides = array<i32>} : memref<8x32xf32, #tpu.memory_space<vmem>>, vector<1x32xf32>,
    %c0_23 = arith.constant 0 : index
    %c0_24 = arith.constant 0 : index
    %54 = vector.load %arg10[%c0_23, %c0_24] : memref<8x32xf32, #tpu.memory_space<vmem>>, vector<8x32xf32>
    %cst_25 = arith.constant dense<0.000000e+00> : vector<8xf32>
    %55 = vector.multi_reduction <add>, %54, %cst_25 [1] : vector<8x32xf32> to vector<8xf32>
    %56 = vector.shape_cast %55 : vector<8xf32> to vector<8x1xf32>
    %cst_26 = arith.constant 3.200000e+01 : f32
    %57 = vector.broadcast %cst_26 : f32 to vector<8x1xf32>
    %58 = arith.divf %56, %57 : vector<8x1xf32>
    %59 = vector.broadcast %58 : vector<8x1xf32> to vector<8x32xf32>
    %60 = arith.subf %54, %59 : vector<8x32xf32>
    %61 = arith.mulf %60, %60 : vector<8x32xf32>
    %cst_27 = arith.constant dense<0.000000e+00> : vector<8xf32>
    %62 = vector.multi_reduction <add>, %61, %cst_27 [1] : vector<8x32xf32> to vector<8xf32>
    %63 = vector.shape_cast %62 : vector<8xf32> to vector<8x1xf32>
    %cst_28 = arith.constant 3.200000e+01 : f32
    %64 = vector.broadcast %cst_28 : f32 to vector<8x1xf32>
    %65 = arith.divf %63, %64 : vector<8x1xf32>
    %66 = vector.broadcast %58 : vector<8x1xf32> to vector<8x32xf32>
    %67 = arith.subf %54, %66 : vector<8x32xf32>
    %cst_29 = arith.constant 9.99999974E-6 : f32
    %68 = vector.broadcast %cst_29 : f32 to vector<8x1xf32>
    %69 = arith.addf %65, %68 : vector<8x1xf32>
    %70 = math.rsqrt %69 : vector<8x1xf32>
    %71 = vector.broadcast %70 : vector<8x1xf32> to vector<8x32xf32>
    %72 = arith.mulf %67, %71 : vector<8x32xf32>
    %c0_30 = arith.constant 0 : index
    %c0_31 = arith.constant 0 : index
    %73 = vector.load %arg5[%c0_30, %c0_31] : memref<3x32xf32, #tpu.memory_space<vmem>>, vector<1x32xf32>
    %74 = vector.broadcast %73 : vector<1x32xf32> to vector<8x32xf32>
    %75 = arith.mulf %72, %74 : vector<8x32xf32>
    %c1_32 = arith.constant 1 : index
    %c0_33 = arith.constant 0 : index
    %76 = vector.load %arg5[%c1_32, %c0_33] : memref<3x32xf32, #tpu.memory_space<vmem>>, vector<1x32xf32>
    %77 = vector.broadcast %76 : vector<1x32xf32> to vector<8x32xf32>
    %78 = arith.addf %75, %77 : vector<8x32xf32>
    %c0_34 = arith.constant 0 : index
    %c0_35 = arith.constant 0 : index
    %79 = vector.load %arg6[%c0_34, %c0_35] : memref<32x32xf32, #tpu.memory_space<vmem>>, vector<32x32xf32>
    %cst_36 = arith.constant dense<0.000000e+00> : vector<8x32xf32>
    %80 = tpu.matmul %78, %79, %cst_36 {dimension_numbers = #tpu.dot_dimension_numbers<[1], [0], [0], [1], [0, 0, 1, 1], [], []>} : vector<8x32xf32>, vector<32x32xf32>, vector<8x32xf32> -> vector<8x32xf32>
    %c2_37 = arith.constant 2 : index
    %c0_38 = arith.constant 0 : index
    %81 = vector.load %arg5[%c2_37, %c0_38] : memref<3x32xf32, #tpu.memory_space<vmem>>, vector<1x32xf32>
    %82 = vector.broadcast %81 : vector<1x32xf32> to vector<8x32xf32>
    %83 = arith.addf %80, %82 : vector<8x32xf32>
    %cst_39 = arith.constant 5.000000e-01 : f32
    %84 = vector.broadcast %cst_39 : f32 to vector<8x32xf32>
    %85 = arith.mulf %84, %83 : vector<8x32xf32>
    %cst_40 = arith.constant 0.707106769 : f32
    %86 = vector.broadcast %cst_40 : f32 to vector<8x32xf32>
    %87 = arith.mulf %83, %86 : vector<8x32xf32>
    %88 = math.erf %87 : vector<8x32xf32>
    %cst_41 = arith.constant 1.000000e+00 : f32
    %89 = vector.broadcast %cst_41 : f32 to vector<8x32xf32>
    %90 = arith.addf %89, %88 : vector<8x32xf32>
    %91 = arith.mulf %85, %90 : vector<8x32xf32>
    %c0_42 = arith.constant 0 : index
    %c0_43 = arith.constant 0 : index
    %92 = vector.load %arg7[%c0_42, %c0_43] : memref<32x128xf32, #tpu.memory_space<vmem>>, vector<32x128xf32>
    %cst_44 = arith.constant dense<0.000000e+00> : vector<8x128xf32>
    %93 = tpu.matmul %91, %92, %cst_44 {dimension_numbers = #tpu.dot_dimension_numbers<[1], [0], [0], [1], [0, 0, 1, 1], [], []>} : vector<8x32xf32>, vector<32x128xf32>, vector<8x128xf32> -> vector<8x128xf32>
    %c0_45 = arith.constant 0 : index
    %c0_46 = arith.constant 0 : index
    %94 = vector.load %arg8[%c0_45, %c0_46] : memref<1x128xf32, #tpu.memory_space<vmem>>, vector<1x128xf32>
    %95 = vector.broadcast %94 : vector<1x128xf32> to vector<8x128xf32>
    %96 = arith.addf %93, %95 : vector<8x128xf32>
    %c0_47 = arith.constant 0 : index
    %c0_48 = arith.constant 0 : index
    %97 = vector.load %arg9[%c0_47, %c0_48] : memref<8x128xf32, #tpu.memory_space<vmem>>, vector<8x128xf32>
    tpu.vector_store %arg9[%c0_47, %c0_48], %96 {strides = array<i32>} : memref<8x128xf32, #tpu.memory_space<vmem>>, vector<8x128xf32>,
    return
  }
  func.func @transform_0(%arg0: i32) -> (i32, i32, i32) {
    %c0_i32 = arith.constant 0 : i32
    %c0_i32_0 = arith.constant 0 : i32
    %c0_i32_1 = arith.constant 0 : i32
    return %arg0, %c0_i32, %c0_i32_0 : i32, i32, i32
  }
  func.func @transform_1(%arg0: i32) -> (i32, i32, i32) {
    %c0_i32 = arith.constant 0 : i32
    %c0_i32_0 = arith.constant 0 : i32
    %c0_i32_1 = arith.constant 0 : i32
    return %arg0, %c0_i32, %c0_i32_0 : i32, i32, i32
  }
  func.func @transform_2(%arg0: i32) -> i32 {
    %c0_i32 = arith.constant 0 : i32
    %c0_i32_0 = arith.constant 0 : i32
    return %c0_i32 : i32
  }
  func.func @transform_3(%arg0: i32) -> (i32, i32) {
    %c0_i32 = arith.constant 0 : i32
    %c0_i32_0 = arith.constant 0 : i32
    %c0_i32_1 = arith.constant 0 : i32
    return %c0_i32, %c0_i32_0 : i32, i32
  }
  func.func @transform_4(%arg0: i32) -> (i32, i32) {
    %c0_i32 = arith.constant 0 : i32
    %c0_i32_0 = arith.constant 0 : i32
    %c0_i32_1 = arith.constant 0 : i32
    return %c0_i32, %c0_i32_0 : i32, i32
  }
  func.func @transform_5(%arg0: i32) -> (i32, i32) {
    %c0_i32 = arith.constant 0 : i32
    %c0_i32_0 = arith.constant 0 : i32
    %c0_i32_1 = arith.constant 0 : i32
    return %c0_i32, %c0_i32_0 : i32, i32
  }
  func.func @transform_6(%arg0: i32) -> (i32, i32) {
    %c0_i32 = arith.constant 0 : i32
    %c0_i32_0 = arith.constant 0 : i32
    %c0_i32_1 = arith.constant 0 : i32
    return %c0_i32, %c0_i32_0 : i32, i32
  }
  func.func @transform_7(%arg0: i32) -> (i32, i32) {
    %c0_i32 = arith.constant 0 : i32
    %c0_i32_0 = arith.constant 0 : i32
    %c0_i32_1 = arith.constant 0 : i32
    return %c0_i32, %c0_i32_0 : i32, i32
  }
  func.func @transform_8(%arg0: i32) -> (i32, i32) {
    %c0_i32 = arith.constant 0 : i32
    %c0_i32_0 = arith.constant 0 : i32
    return %arg0, %c0_i32 : i32, i32
  }
}

</mosaic_0001>

<llo_original>
// kernel: tpu_custom_call.1
$region0: #{tpu_custom_call.1}
  #allocation0 [shape = 'u32[]', space=smem, size = 0x4, offset = 0x4, fixed_abs, tag = 'smem constant byte address 0x4 - core index']
  #allocation1 [shape = 'u32[144,128]{1,0:T(1,128)}', space=vmem, size = 0x12000, scoped, tag = 'internal scratch']
  #allocation2 [shape = 'f32[8,32]{1,0:T(8,128)}', space=vmem, size = 0x1000, scoped, tag = 'scratch operand']
  %s0 = inlined_call_operand.hbm [shape: bf16[16,16,32], index: 0, kind: input, shape index: {}]
  %s1 = inlined_call_operand.hbm [shape: f32[16,1,16], index: 1, kind: input, shape index: {}]
  %s2 = inlined_call_operand.vmem [shape: f32[2], index: 2, kind: input, shape index: {}]
  %s3 = inlined_call_operand.vmem [shape: f32[1,32], index: 3, kind: input, shape index: {}]
  %s4 = inlined_call_operand.vmem [shape: f32[3,32], index: 4, kind: input, shape index: {}]
  %s5 = inlined_call_operand.hbm [shape: f32[32,32], index: 5, kind: input, shape index: {}]
  %s6 = inlined_call_operand.hbm [shape: f32[32,128], index: 6, kind: input, shape index: {}]
  %s7 = inlined_call_operand.vmem [shape: f32[1,128], index: 7, kind: input, shape index: {}]
  %s8 = inlined_call_operand.hbm [shape: f32[16,128], index: 8, kind: output, shape index: {}]
  %s9 = sld [smem:[#allocation0]]
  $region85: #{tpu_custom_call.1} parent=0
    _
  %s11 = ssub.s32 1, %s9
  %s12 = scalar_select 0, %s11, %s9
  $region1: #{tpu_custom_call.1} parent=0
    #allocation3 [shape = 'u8[65536]{0}', space=vmem, size = 0x10000, scoped, tag = 'input window, operand 0']
    #allocation4 [shape = 's32[2]{0}', space=sflag, size = 0x8, scoped, tag = 'scoped memory for tpu_custom_call.1']
    #allocation5 [shape = 's32[2]{0}', space=sflag, size = 0x8, scoped, tag = 'scoped memory for tpu_custom_call.1']
    #allocation6 [shape = 's32[2]{0}', space=sflag, size = 0x8, scoped, tag = 'scoped memory for tpu_custom_call.1']
    #allocation7 [shape = 'u8[8192]{0}', space=vmem, size = 0x2000, scoped, tag = 'input window, operand 1']
    #allocation8 [shape = 's32[2]{0}', space=sflag, size = 0x8, scoped, tag = 'scoped memory for tpu_custom_call.1']
    #allocation9 [shape = 'u8[512]{0}', space=smem, size = 0x200, scoped, tag = 'input window, operand 2, single buffered']
    #allocation10 [shape = 'u8[16384]{0}', space=vmem, size = 0x4000, scoped, tag = 'input window, operand 5, single buffered']
    #allocation11 [shape = 'u8[16384]{0}', space=vmem, size = 0x4000, scoped, tag = 'input window, operand 6, single buffered']
    #allocation12 [shape = 's32[1]{0}', space=sflag, size = 0x4, scoped, tag = 'scoped memory for tpu_custom_call.1']
    #allocation13 [shape = 'u8[8192]{0}', space=vmem, size = 0x2000, scoped, tag = 'output window, operand 0']
    %13 = vsyncpa [#allocation4], 0
    %s14 = scalar_lea.sflag [#allocation4], 1
    %15 = vsyncpa %s14, 0
    %16 = vsyncpa [#allocation8], 0
    %s17 = scalar_lea.sflag [#allocation8], 1
    %18 = vsyncpa %s17, 0
    %19 = vsyncpa [#allocation6], 0
    %20 = vsyncpa [#allocation12], 0
    %21 = vsyncpa [#allocation5], 0
    %s22 = scalar_lea.sflag [#allocation5], 1
    %23 = vsyncpa %s22, 0
    loop: start=0, step=1, limit=4
    $region2: #{tpu_custom_call.1} parent=1 // loop_pre_header
      _
    $region3: #{tpu_custom_call.1} parent=1 // loop_header
      %s25 = sphi 0, %s29
      %p26 = scmp.ge.s32.totalorder %s25, 4
      %s35 = sphi 0, %s37
      %s38 = sphi 0, %s35
      %s39 = sphi 0, %s38
      %s55 = sphi 0, %s39
      %s61 = sphi 0, %s63
      %s64 = sphi 0, %s61
      %s65 = sphi 0, %s64
      %s81 = sphi 0, %s65
      %s85 = sphi 0, %s85
      %s87 = sphi 0, %s85
      %s88 = sphi 0, %s87
      %s102 = sphi 0, %s88
      %s106 = sphi 0, %s106
      %s108 = sphi 0, %s106
      %s109 = sphi 0, %s108
      %s123 = sphi 0, %s109
      %s127 = sphi 0, %s127
      %s129 = sphi 0, %s127
      %s130 = sphi 0, %s129
      %s144 = sphi 0, %s130
      %s148 = sphi 0, %s148
      %s150 = sphi 0, %s148
      %s151 = sphi 0, %s150
      %s165 = sphi 0, %s151
      %s169 = sphi 0, %s169
      %s171 = sphi 0, %s169
      %s172 = sphi 0, %s171
      %s186 = sphi 0, %s172
      %s190 = sphi 0, %s190
      %s192 = sphi 0, %s190
      %s193 = sphi 0, %s192
      %s207 = sphi 0, %s193
      %s213 = sphi 0, %s215
      %s216 = sphi 0, %s213
      %s217 = sphi 0, %s216
      %s233 = sphi 0, %s217
    $region4: #{tpu_custom_call.1} parent=1 // loop_header_branch
      %28 = sbr.rel (%p26) target = $region8
    $region5: #{tpu_custom_call.1} parent=1 // loop_body
      %s30 = ssub.s32 %s25, 1
      %s31 = ssub.s32 %s25, 2
      %s32 = sadd.s32 %s25, 1
      %s33 = ssub.s32 %s25, %s32
      %p34 = scmp.eq.s32.totalorder %s33, 0
      %s36 = sadd.s32 %s35, 1
      %s37 = scalar_select %p34, %s35, %s36
      %p40 = pneg %p34
      %p41 = scmp.eq.s32.totalorder %s25, 1
      %p42 = por %p40, %p41
      %p43 = scmp.ne.s32.totalorder %s35, %s38
      %p44 = scmp.eq.s32.totalorder %s25, 0
      %p45 = por %p43, %p44
      %p46 = scmp.ne.s32.totalorder %s35, %s38
      %p47 = scmp.eq.s32.totalorder %s30, 1
      %p48 = por %p46, %p47
      %p49 = scmp.ne.s32.totalorder %s38, %s39
      %p50 = scmp.eq.s32.totalorder %s30, 0
      %p51 = por %p49, %p50
      %p52 = scmp.ne.s32.totalorder %s38, %s39
      %p53 = scmp.eq.s32.totalorder %s31, 1
      %p54 = por %p52, %p53
      %p56 = scmp.ne.s32.totalorder %s39, %s55
      %p57 = scmp.eq.s32.totalorder %s31, 0
      %p58 = por %p56, %p57
      %s59 = ssub.s32 %s25, %s32
      %p60 = scmp.eq.s32.totalorder %s59, 0
      %s62 = sadd.s32 %s61, 1
      %s63 = scalar_select %p60, %s61, %s62
      %p66 = pneg %p60
      %p67 = scmp.eq.s32.totalorder %s25, 1
      %p68 = por %p66, %p67
      %p69 = scmp.ne.s32.totalorder %s61, %s64
      %p70 = scmp.eq.s32.totalorder %s25, 0
      %p71 = por %p69, %p70
      %p72 = scmp.ne.s32.totalorder %s61, %s64
      %p73 = scmp.eq.s32.totalorder %s30, 1
      %p74 = por %p72, %p73
      %p75 = scmp.ne.s32.totalorder %s64, %s65
      %p76 = scmp.eq.s32.totalorder %s30, 0
      %p77 = por %p75, %p76
      %p78 = scmp.ne.s32.totalorder %s64, %s65
      %p79 = scmp.eq.s32.totalorder %s31, 1
      %p80 = por %p78, %p79
      %p82 = scmp.ne.s32.totalorder %s65, %s81
      %p83 = scmp.eq.s32.totalorder %s31, 0
      %p84 = por %p82, %p83
      %s86 = sadd.s32 %s85, 1
      %p89 = scmp.eq.s32.totalorder %s25, 1
      %p90 = scmp.ne.s32.totalorder %s85, %s87
      %p91 = scmp.eq.s32.totalorder %s25, 0
      %p92 = por %p90, %p91
      %p93 = scmp.ne.s32.totalorder %s85, %s87
      %p94 = scmp.eq.s32.totalorder %s30, 1
      %p95 = por %p93, %p94
      %p96 = scmp.ne.s32.totalorder %s87, %s88
      %p97 = scmp.eq.s32.totalorder %s30, 0
      %p98 = por %p96, %p97
      %p99 = scmp.ne.s32.totalorder %s87, %s88
      %p100 = scmp.eq.s32.totalorder %s31, 1
      %p101 = por %p99, %p100
      %p103 = scmp.ne.s32.totalorder %s88, %s102
      %p104 = scmp.eq.s32.totalorder %s31, 0
      %p105 = por %p103, %p104
      %s107 = sadd.s32 %s106, 1
      %p110 = scmp.eq.s32.totalorder %s25, 1
      %p111 = scmp.ne.s32.totalorder %s106, %s108
      %p112 = scmp.eq.s32.totalorder %s25, 0
      %p113 = por %p111, %p112
      %p114 = scmp.ne.s32.totalorder %s106, %s108
      %p115 = scmp.eq.s32.totalorder %s30, 1
      %p116 = por %p114, %p115
      %p117 = scmp.ne.s32.totalorder %s108, %s109
      %p118 = scmp.eq.s32.totalorder %s30, 0
      %p119 = por %p117, %p118
      %p120 = scmp.ne.s32.totalorder %s108, %s109
      %p121 = scmp.eq.s32.totalorder %s31, 1
      %p122 = por %p120, %p121
      %p124 = scmp.ne.s32.totalorder %s109, %s123
      %p125 = scmp.eq.s32.totalorder %s31, 0
      %p126 = por %p124, %p125
      %s128 = sadd.s32 %s127, 1
      %p131 = scmp.eq.s32.totalorder %s25, 1
      %p132 = scmp.ne.s32.totalorder %s127, %s129
      %p133 = scmp.eq.s32.totalorder %s25, 0
      %p134 = por %p132, %p133
      %p135 = scmp.ne.s32.totalorder %s127, %s129
      %p136 = scmp.eq.s32.totalorder %s30, 1
      %p137 = por %p135, %p136
      %p138 = scmp.ne.s32.totalorder %s129, %s130
      %p139 = scmp.eq.s32.totalorder %s30, 0
      %p140 = por %p138, %p139
      %p141 = scmp.ne.s32.totalorder %s129, %s130
      %p142 = scmp.eq.s32.totalorder %s31, 1
      %p143 = por %p141, %p142
      %p145 = scmp.ne.s32.totalorder %s130, %s144
      %p146 = scmp.eq.s32.totalorder %s31, 0
      %p147 = por %p145, %p146
      %s149 = sadd.s32 %s148, 1
      %p152 = scmp.eq.s32.totalorder %s25, 1
      %p153 = scmp.ne.s32.totalorder %s148, %s150
      %p154 = scmp.eq.s32.totalorder %s25, 0
      %p155 = por %p153, %p154
      %p156 = scmp.ne.s32.totalorder %s148, %s150
      %p157 = scmp.eq.s32.totalorder %s30, 1
      %p158 = por %p156, %p157
      %p159 = scmp.ne.s32.totalorder %s150, %s151
      %p160 = scmp.eq.s32.totalorder %s30, 0
      %p161 = por %p159, %p160
      %p162 = scmp.ne.s32.totalorder %s150, %s151
      %p163 = scmp.eq.s32.totalorder %s31, 1
      %p164 = por %p162, %p163
      %p166 = scmp.ne.s32.totalorder %s151, %s165
      %p167 = scmp.eq.s32.totalorder %s31, 0
      %p168 = por %p166, %p167
      %s170 = sadd.s32 %s169, 1
      %p173 = scmp.eq.s32.totalorder %s25, 1
      %p174 = scmp.ne.s32.totalorder %s169, %s171
      %p175 = scmp.eq.s32.totalorder %s25, 0
      %p176 = por %p174, %p175
      %p177 = scmp.ne.s32.totalorder %s169, %s171
      %p178 = scmp.eq.s32.totalorder %s30, 1
      %p179 = por %p177, %p178
      %p180 = scmp.ne.s32.totalorder %s171, %s172
      %p181 = scmp.eq.s32.totalorder %s30, 0
      %p182 = por %p180, %p181
      %p183 = scmp.ne.s32.totalorder %s171, %s172
      %p184 = scmp.eq.s32.totalorder %s31, 1
      %p185 = por %p183, %p184
      %p187 = scmp.ne.s32.totalorder %s172, %s186
      %p188 = scmp.eq.s32.totalorder %s31, 0
      %p189 = por %p187, %p188
      %s191 = sadd.s32 %s190, 1
      %p194 = scmp.eq.s32.totalorder %s25, 1
      %p195 = scmp.ne.s32.totalorder %s190, %s192
      %p196 = scmp.eq.s32.totalorder %s25, 0
      %p197 = por %p195, %p196
      %p198 = scmp.ne.s32.totalorder %s190, %s192
      %p199 = scmp.eq.s32.totalorder %s30, 1
      %p200 = por %p198, %p199
      %p201 = scmp.ne.s32.totalorder %s192, %s193
      %p202 = scmp.eq.s32.totalorder %s30, 0
      %p203 = por %p201, %p202
      %p204 = scmp.ne.s32.totalorder %s192, %s193
      %p205 = scmp.eq.s32.totalorder %s31, 1
      %p206 = por %p204, %p205
      %p208 = scmp.ne.s32.totalorder %s193, %s207
      %p209 = scmp.eq.s32.totalorder %s31, 0
      %p210 = por %p208, %p209
      %s211 = ssub.s32 %s25, %s32
      %p212 = scmp.eq.s32.totalorder %s211, 0
      %s214 = sadd.s32 %s213, 1
      %s215 = scalar_select %p212, %s213, %s214
      %p218 = pneg %p212
      %p219 = scmp.eq.s32.totalorder %s25, 1
      %p220 = por %p218, %p219
      %p221 = scmp.ne.s32.totalorder %s213, %s216
      %p222 = scmp.eq.s32.totalorder %s25, 0
      %p223 = por %p221, %p222
      %p224 = scmp.ne.s32.totalorder %s213, %s216
      %p225 = scmp.eq.s32.totalorder %s30, 1
      %p226 = por %p224, %p225
      %p227 = scmp.ne.s32.totalorder %s216, %s217
      %p228 = scmp.eq.s32.totalorder %s30, 0
      %p229 = por %p227, %p228
      %p230 = scmp.ne.s32.totalorder %s216, %s217
      %p231 = scmp.eq.s32.totalorder %s31, 1
      %p232 = por %p230, %p231
      %p234 = scmp.ne.s32.totalorder %s217, %s233
      %p235 = scmp.eq.s32.totalorder %s31, 0
      %p236 = por %p234, %p235
      %p237 = scmp.le.s32.totalorder 1, %s25
      %p238 = scmp.lt.s32.totalorder %s25, 3
      %p239 = pnand %p237, %p238
      %p240 = pneg %p239
      // Predicated region
      $region9: #{tpu_custom_call.1} parent=5 // pred_check
        _
      $region10: #{tpu_custom_call.1} parent=5 // pred_check_branch
        %242 = sbr.rel (%p239) target = $region12
      $region11: #{tpu_custom_call.1} parent=5 // pred_region
        %s243 = ssub.s32 %s25, 1
        // Predicated region
        $region13: #{tpu_custom_call.1} parent=11 // pred_check
          %p244 = pneg %p98
        $region14: #{tpu_custom_call.1} parent=11 // pred_check_branch
          %246 = sbr.rel (%p244) target = $region16
        $region15: #{tpu_custom_call.1} parent=11 // pred_region
          %s248 = ssub.s32 16, 16
          %249 = vsyncadd [#allocation6], %s248
          %s251 = sshll.u32 %s2, 4
          %s252 = int_to_ptr.vmem [resolvable:$true] %s251
          %254 = dma.vmem_to_smem %s252, 16, [#allocation9], [#allocation6]
        $region16: #{tpu_custom_call.1} parent=11 // pred_fallthru
          _
        // Predicated region
        $region17: #{tpu_custom_call.1} parent=11 // pred_check
          %p255 = pneg %p119
        $region18: #{tpu_custom_call.1} parent=11 // pred_check_branch
          %257 = sbr.rel (%p255) target = $region20
        $region19: #{tpu_custom_call.1} parent=11 // pred_region
          _
        $region20: #{tpu_custom_call.1} parent=11 // pred_fallthru
          _
        // Predicated region
        $region21: #{tpu_custom_call.1} parent=11 // pred_check
          %p258 = pneg %p140
        $region22: #{tpu_custom_call.1} parent=11 // pred_check_branch
          %260 = sbr.rel (%p258) target = $region24
        $region23: #{tpu_custom_call.1} parent=11 // pred_region
          _
        $region24: #{tpu_custom_call.1} parent=11 // pred_fallthru
          _
        // Predicated region
        $region25: #{tpu_custom_call.1} parent=11 // pred_check
          %p261 = pneg %p161
        $region26: #{tpu_custom_call.1} parent=11 // pred_check_branch
          %263 = sbr.rel (%p261) target = $region28
        $region27: #{tpu_custom_call.1} parent=11 // pred_region
          %s265 = ssub.s32 512, 512
          %266 = vsyncadd [#allocation8], %s265
          %s267 = sshll.u32 [#allocation10], 4
          %s268 = int_to_ptr.vmem [resolvable:$true] %s267
          %273 = dma.hbm_to_vmem [thread:$0]  %s5, 512, %s268, [#allocation8], 128, 128, 8
        $region28: #{tpu_custom_call.1} parent=11 // pred_fallthru
          _
        // Predicated region
        $region29: #{tpu_custom_call.1} parent=11 // pred_check
          %p274 = pneg %p182
        $region30: #{tpu_custom_call.1} parent=11 // pred_check_branch
          %276 = sbr.rel (%p274) target = $region32
        $region31: #{tpu_custom_call.1} parent=11 // pred_region
          %s278 = ssub.s32 512, 512
          %279 = vsyncadd [#allocation12], %s278
          %s280 = sshll.u32 [#allocation11], 4
          %s281 = int_to_ptr.vmem [resolvable:$true] %s280
          %286 = dma.hbm_to_vmem [thread:$0]  %s6, 512, %s281, [#allocation12], 128, 128, 8
        $region32: #{tpu_custom_call.1} parent=11 // pred_fallthru
          _
        // Predicated region
        $region33: #{tpu_custom_call.1} parent=11 // pred_check
          %p287 = pneg %p203
        $region34: #{tpu_custom_call.1} parent=11 // pred_check_branch
          %289 = sbr.rel (%p287) target = $region36
        $region35: #{tpu_custom_call.1} parent=11 // pred_region
          _
        $region36: #{tpu_custom_call.1} parent=11 // pred_fallthru
          _
      $region12: #{tpu_custom_call.1} parent=5 // pred_fallthru
        _
      %p290 = scmp.lt.s32.totalorder %s25, 2
      // Predicated region
      $region37: #{tpu_custom_call.1} parent=5 // pred_check
        %p291 = pneg %p290
      $region38: #{tpu_custom_call.1} parent=5 // pred_check_branch
        %293 = sbr.rel (%p291) target = $region40
      $region39: #{tpu_custom_call.1} parent=5 // pred_region
        // Predicated region
        $region41: #{tpu_custom_call.1} parent=39 // pred_check
          %p294 = pneg %p45
        $region42: #{tpu_custom_call.1} parent=39 // pred_check_branch
          %296 = sbr.rel (%p294) target = $region44
        $region43: #{tpu_custom_call.1} parent=39 // pred_region
          %s297 = sand.u32 %s35, 1
          %s298 = scalar_lea.sflag [#allocation4], %s297
          %s299 = sand.u32 %s35, 1
          %s300 = smul.addr %s299, 64
          %s301 = scalar_lea.vmem [#allocation3], %s300
          %s302 = smul.u32 8, %s25
          %s304 = ssub.s32 1024, 1024
          %305 = vsyncadd %s298, %s304
          %s306 = smul.addr %s302, 2
          %s307 = smul.addr %s306, 64
          %s308 = scalar_lea.hbm %s0, %s307
          %s309 = sshll.u32 %s301, 4
          %s310 = int_to_ptr.vmem [resolvable:$true] %s309
          %315 = dma.hbm_to_vmem [thread:$0]  %s308, 1024, %s310, %s298, 64, 64, 4
        $region44: #{tpu_custom_call.1} parent=39 // pred_fallthru
          _
        // Predicated region
        $region45: #{tpu_custom_call.1} parent=39 // pred_check
          %p316 = pneg %p71
        $region46: #{tpu_custom_call.1} parent=39 // pred_check_branch
          %318 = sbr.rel (%p316) target = $region48
        $region47: #{tpu_custom_call.1} parent=39 // pred_region
          %s319 = sand.u32 %s25, 1
          %s320 = scalar_lea.sflag [#allocation8], %s319
          %s321 = sand.u32 %s61, 1
          %s322 = smul.addr %s321, 8
          %s323 = scalar_lea.vmem [#allocation7], %s322
          %s324 = smul.u32 8, %s25
          %s326 = ssub.s32 128, 128
          %327 = vsyncadd %s320, %s326
          %s328 = smul.addr %s324, 16
          %s329 = scalar_lea.hbm %s1, %s328
          %s330 = sshll.u32 %s323, 4
          %s331 = int_to_ptr.vmem [resolvable:$true] %s330
          %336 = dma.hbm_to_vmem [thread:$0]  %s329, 128, %s331, %s320, 16, 16, 1
        $region48: #{tpu_custom_call.1} parent=39 // pred_fallthru
          _
      $region40: #{tpu_custom_call.1} parent=5 // pred_fallthru
        _
      %p337 = scmp.le.s32.totalorder 1, %s25
      %p338 = scmp.lt.s32.totalorder %s25, 3
      %p339 = pnand %p337, %p338
      %p340 = pneg %p339
      // Predicated region
      $region49: #{tpu_custom_call.1} parent=5 // pred_check
        _
      $region50: #{tpu_custom_call.1} parent=5 // pred_check_branch
        %342 = sbr.rel (%p339) target = $region52
      $region51: #{tpu_custom_call.1} parent=5 // pred_region
        %s343 = ssub.s32 %s25, 1
        %s344 = sand.u32 %s38, 1
        %s345 = scalar_lea.sflag [#allocation4], %s344
        %s346 = sand.u32 %s38, 1
        %s347 = smul.addr %s346, 64
        %s348 = scalar_lea.vmem [#allocation3], %s347
        // Predicated region
        $region53: #{tpu_custom_call.1} parent=51 // pred_check
          %p349 = pneg %p51
        $region54: #{tpu_custom_call.1} parent=51 // pred_check_branch
          %351 = sbr.rel (%p349) target = $region56
        $region55: #{tpu_custom_call.1} parent=51 // pred_region
          %352 = dma.done %s345, 1024
        $region56: #{tpu_custom_call.1} parent=51 // pred_fallthru
          _
        %s353 = sand.u32 %s30, 1
        %s354 = scalar_lea.sflag [#allocation8], %s353
        %s355 = sand.u32 %s64, 1
        %s356 = smul.addr %s355, 8
        %s357 = scalar_lea.vmem [#allocation7], %s356
        // Predicated region
        $region57: #{tpu_custom_call.1} parent=51 // pred_check
          %p358 = pneg %p77
        $region58: #{tpu_custom_call.1} parent=51 // pred_check_branch
          %360 = sbr.rel (%p358) target = $region60
        $region59: #{tpu_custom_call.1} parent=51 // pred_region
          %361 = dma.done %s354, 128
        $region60: #{tpu_custom_call.1} parent=51 // pred_fallthru
          _
        // Predicated region
        $region61: #{tpu_custom_call.1} parent=51 // pred_check
          %p362 = pneg %p98
        $region62: #{tpu_custom_call.1} parent=51 // pred_check_branch
          %364 = sbr.rel (%p362) target = $region64
        $region63: #{tpu_custom_call.1} parent=51 // pred_region
          %365 = dma.done [#allocation6], 16
        $region64: #{tpu_custom_call.1} parent=51 // pred_fallthru
          _
        // Predicated region
        $region65: #{tpu_custom_call.1} parent=51 // pred_check
          %p366 = pneg %p161
        $region66: #{tpu_custom_call.1} parent=51 // pred_check_branch
          %368 = sbr.rel (%p366) target = $region68
        $region67: #{tpu_custom_call.1} parent=51 // pred_region
          %369 = dma.done [#allocation8], 512
        $region68: #{tpu_custom_call.1} parent=51 // pred_fallthru
          _
        // Predicated region
        $region69: #{tpu_custom_call.1} parent=51 // pred_check
          %p370 = pneg %p182
        $region70: #{tpu_custom_call.1} parent=51 // pred_check_branch
          %372 = sbr.rel (%p370) target = $region72
        $region71: #{tpu_custom_call.1} parent=51 // pred_region
          %373 = dma.done [#allocation12], 512
        $region72: #{tpu_custom_call.1} parent=51 // pred_fallthru
          _
        %374 = sfence
        %s375 = sand.u32 %s38, 1
        %s376 = scalar_lea.sflag [#allocation4], %s375
        %s377 = sand.u32 %s38, 1
        %s378 = smul.addr %s377, 64
        %s379 = scalar_lea.vmem [#allocation3], %s378
        %p380 = pneg %p51
        %p381 = pneg %p48
        %s382 = sand.u32 %s30, 1
        %s383 = scalar_lea.sflag [#allocation8], %s382
        %s384 = sand.u32 %s64, 1
        %s385 = smul.addr %s384, 8
        %s386 = scalar_lea.vmem [#allocation7], %s385
        %p387 = pneg %p77
        %p388 = pneg %p74
        %p389 = pneg %p98
        %p390 = pneg %p95
        %p391 = pneg %p119
        %p392 = pneg %p116
        %p393 = pneg %p140
        %p394 = pneg %p137
        %p395 = pneg %p161
        %p396 = pneg %p158
        %p397 = pneg %p182
        %p398 = pneg %p179
        %p399 = pneg %p203
        %p400 = pneg %p200
        %p401 = pneg %p229
        %p402 = pneg %p226
        %s403 = sand.u32 %s216, 1
        %s404 = scalar_lea.sflag [#allocation5], %s403
        %s405 = sand.u32 %s216, 1
        %s406 = smul.addr %s405, 8
        %s407 = scalar_lea.vmem [#allocation13], %s406
        %s408 = smul.u32 8, %s30
        %s409 = smul.u32 8, %s30
        %v410 = vld [vmem:[%s348] sm:$0xf]
        %v411 = vld [vmem:[%s348 + $0x4] sm:$0xf]
        %v412 = vld [vmem:[%s348 + $0x8] sm:$0xf]
        %v413 = vld [vmem:[%s348 + $0xc] sm:$0xf]
        %v414 = vld [vmem:[%s348 + $0x10] sm:$0xf]
        %v415 = vld [vmem:[%s348 + $0x14] sm:$0xf]
        %v416 = vld [vmem:[%s348 + $0x18] sm:$0xf]
        %v417 = vld [vmem:[%s348 + $0x1c] sm:$0xf]
        %v418 = vld [vmem:[%s348 + $0x20] sm:$0xf]
        %v419 = vld [vmem:[%s348 + $0x24] sm:$0xf]
        %v420 = vld [vmem:[%s348 + $0x28] sm:$0xf]
        %v421 = vld [vmem:[%s348 + $0x2c] sm:$0xf]
        %v422 = vld [vmem:[%s348 + $0x30] sm:$0xf]
        %v423 = vld [vmem:[%s348 + $0x34] sm:$0xf]
        %v424 = vld [vmem:[%s348 + $0x38] sm:$0xf]
        %v425 = vld [vmem:[%s348 + $0x3c] sm:$0xf]
        %v426 = vunpack.c.l.bf16 %v410
        %v427 = vunpack.c.l.bf16 %v411
        %v428 = vunpack.c.l.bf16 %v412
        %v429 = vunpack.c.l.bf16 %v413
        %v430 = vunpack.c.l.bf16 %v414
        %v431 = vunpack.c.l.bf16 %v415
        %v432 = vunpack.c.l.bf16 %v416
        %v433 = vunpack.c.l.bf16 %v417
        %v434 = vunpack.c.l.bf16 %v418
        %v435 = vunpack.c.l.bf16 %v419
        %v436 = vunpack.c.l.bf16 %v420
        %v437 = vunpack.c.l.bf16 %v421
        %v438 = vunpack.c.l.bf16 %v422
        %v439 = vunpack.c.l.bf16 %v423
        %v440 = vunpack.c.l.bf16 %v424
        %v441 = vunpack.c.l.bf16 %v425
        %v442 = vld [vmem:[%s357] sm:$0x1]
        %v443 = vld [vmem:[%s357 + $0x1] sm:$0x1]
        %v444 = vld [vmem:[%s357 + $0x2] sm:$0x1]
        %v445 = vld [vmem:[%s357 + $0x3] sm:$0x1]
        %v446 = vld [vmem:[%s357 + $0x4] sm:$0x1]
        %v447 = vld [vmem:[%s357 + $0x5] sm:$0x1]
        %v448 = vld [vmem:[%s357 + $0x6] sm:$0x1]
        %v449 = vld [vmem:[%s357 + $0x7] sm:$0x1]
        %s450 = sld [smem:[#allocation9]]
        %s451 = sld [smem:[#allocation9 + $0x1]]
        %v452 = vld [vmem:[%s3] sm:$0x1]
        %v453 = vstv %s450
        %vm454 = vcmask 261120
        %v456 = vsel %vm454, %v452, 0
        %v459 = vsel %vm454, %v426, 0
        %v462 = vsel %vm454, %v427, 0
        %464 = vmatprep.subr.mxu0 0.0
        %465 = vmatpush1.xpose.msra.mxu0 0.0
        %466 = vmatprep.subr.mxu0 0.0
        %467 = vmatpush1.xpose.msra.mxu0 0.0
        %468 = vmatprep.subr.mxu0 0.0
        %469 = vmatpush1.xpose.msra.mxu0 0.0
        %470 = vmatprep.subr.mxu0 0.0
        %471 = vmatpush1.xpose.msra.mxu0 0.0
        %472 = vmatprep.subr.mxu0 0.0
        %473 = vmatpush1.xpose.msra.mxu0 0.0
        %474 = vmatprep.subr.mxu0 0.0
        %475 = vmatpush1.xpose.msra.mxu0 0.0
        %476 = vmatprep.subr.mxu0 0.0
        %477 = vmatpush1.xpose.msra.mxu0 0.0
        %478 = vmatprep.subr.mxu0 0.0
        %479 = vmatpush1.xpose.msra.mxu0 0.0
        %480 = vmatprep.subr.mxu0 0.0
        %481 = vmatpush1.xpose.msra.mxu0 0.0
        %482 = vmatprep.subr.mxu0 0.0
        %483 = vmatpush1.xpose.msra.mxu0 0.0
        %484 = vmatprep.subr.mxu0 0.0
        %485 = vmatpush1.xpose.msra.mxu0 0.0
        %486 = vmatprep.subr.mxu0 0.0
        %487 = vmatpush1.xpose.msra.mxu0 0.0
        %488 = vmatprep.subr.mxu0 0.0
        %489 = vmatpush1.xpose.msra.mxu0 0.0
        %490 = vmatprep.subr.mxu0 0.0
        %491 = vmatpush1.xpose.msra.mxu0 0.0
        %492 = vmatprep.subr.mxu0 0.0
        %493 = vmatpush1.xpose.msra.mxu0 %v462
        %494 = vmatprep.subr.mxu0 0.0
        %495 = vmatpush1.xpose.msra.mxu0 %v459
        %496 = vmatprep.subr.mxu0 0.0
        %497 = vmatpush2.xpose.msra.mxu0 0.0
        %498 = vmatprep.subr.mxu0 0.0
        %499 = vmatpush2.xpose.msra.mxu0 0.0
        %500 = vmatprep.subr.mxu0 0.0
        %501 = vmatpush2.xpose.msra.mxu0 0.0
        %502 = vmatprep.subr.mxu0 0.0
        %503 = vmatpush2.xpose.msra.mxu0 0.0
        %504 = vmatprep.subr.mxu0 0.0
        %505 = vmatpush2.xpose.msra.mxu0 0.0
        %506 = vmatprep.subr.mxu0 0.0
        %507 = vmatpush2.xpose.msra.mxu0 0.0
        %508 = vmatprep.subr.mxu0 0.0
        %509 = vmatpush2.xpose.msra.mxu0 0.0
        %510 = vmatprep.subr.mxu0 0.0
        %511 = vmatpush2.xpose.msra.mxu0 0.0
        %512 = vmatprep.subr.mxu0 0.0
        %513 = vmatpush2.xpose.msra.mxu0 0.0
        %514 = vmatprep.subr.mxu0 0.0
        %515 = vmatpush2.xpose.msra.mxu0 0.0
        %516 = vmatprep.subr.mxu0 0.0
        %517 = vmatpush2.xpose.msra.mxu0 0.0
        %518 = vmatprep.subr.mxu0 0.0
        %519 = vmatpush2.xpose.msra.mxu0 0.0
        %520 = vmatprep.subr.mxu0 0.0
        %521 = vmatpush2.xpose.msra.mxu0 0.0
        %522 = vmatprep.subr.mxu0 0.0
        %523 = vmatpush2.xpose.msra.mxu0 0.0
        %524 = vmatprep.subr.mxu0 0.0
        %525 = vmatpush2.xpose.msra.mxu0 0.0
        %526 = vmatprep.subr.mxu0 0.0
        %527 = vmatpush2.xpose.msra.mxu0 0.0
        %528 = vmatprep.mubr.f32.mxu0 0.0
        %529 = vmatmul.mubr.f32.gmra.mxu0 %v456
        %v530 = vpop.f32.mrf.mxu0
        %v531 = vadd.f32 %v453, %v530
        %v532 = vpop.f32.mrf.mxu0
        %533 = vdwg.mxu0
        %v535 = vsel %vm454, %v428, 0
        %v538 = vsel %vm454, %v429, 0
        %540 = vmatprep.subr.mxu0 0.0
        %541 = vmatpush1.xpose.msra.mxu0 0.0
        %542 = vmatprep.subr.mxu0 0.0
        %543 = vmatpush1.xpose.msra.mxu0 0.0
        %544 = vmatprep.subr.mxu0 0.0
        %545 = vmatpush1.xpose.msra.mxu0 0.0
        %546 = vmatprep.subr.mxu0 0.0
        %547 = vmatpush1.xpose.msra.mxu0 0.0
        %548 = vmatprep.subr.mxu0 0.0
        %549 = vmatpush1.xpose.msra.mxu0 0.0
        %550 = vmatprep.subr.mxu0 0.0
        %551 = vmatpush1.xpose.msra.mxu0 0.0
        %552 = vmatprep.subr.mxu0 0.0
        %553 = vmatpush1.xpose.msra.mxu0 0.0
        %554 = vmatprep.subr.mxu0 0.0
        %555 = vmatpush1.xpose.msra.mxu0 0.0
        %556 = vmatprep.subr.mxu0 0.0
        %557 = vmatpush1.xpose.msra.mxu0 0.0
        %558 = vmatprep.subr.mxu0 0.0
        %559 = vmatpush1.xpose.msra.mxu0 0.0
        %560 = vmatprep.subr.mxu0 0.0
        %561 = vmatpush1.xpose.msra.mxu0 0.0
        %562 = vmatprep.subr.mxu0 0.0
        %563 = vmatpush1.xpose.msra.mxu0 0.0
        %564 = vmatprep.subr.mxu0 0.0
        %565 = vmatpush1.xpose.msra.mxu0 0.0
        %566 = vmatprep.subr.mxu0 0.0
        %567 = vmatpush1.xpose.msra.mxu0 0.0
        %568 = vmatprep.subr.mxu0 0.0
        %569 = vmatpush1.xpose.msra.mxu0 %v538
        %570 = vmatprep.subr.mxu0 0.0
        %571 = vmatpush1.xpose.msra.mxu0 %v535
        %572 = vmatprep.subr.mxu0 0.0
        %573 = vmatpush2.xpose.msra.mxu0 0.0
        %574 = vmatprep.subr.mxu0 0.0
        %575 = vmatpush2.xpose.msra.mxu0 0.0
        %576 = vmatprep.subr.mxu0 0.0
        %577 = vmatpush2.xpose.msra.mxu0 0.0
        %578 = vmatprep.subr.mxu0 0.0
        %579 = vmatpush2.xpose.msra.mxu0 0.0
        %580 = vmatprep.subr.mxu0 0.0
        %581 = vmatpush2.xpose.msra.mxu0 0.0
        %582 = vmatprep.subr.mxu0 0.0
        %583 = vmatpush2.xpose.msra.mxu0 0.0
        %584 = vmatprep.subr.mxu0 0.0
        %585 = vmatpush2.xpose.msra.mxu0 0.0
        %586 = vmatprep.subr.mxu0 0.0
        %587 = vmatpush2.xpose.msra.mxu0 0.0
        %588 = vmatprep.subr.mxu0 0.0
        %589 = vmatpush2.xpose.msra.mxu0 0.0
        %590 = vmatprep.subr.mxu0 0.0
        %591 = vmatpush2.xpose.msra.mxu0 0.0
        %592 = vmatprep.subr.mxu0 0.0
        %593 = vmatpush2.xpose.msra.mxu0 0.0
        %594 = vmatprep.subr.mxu0 0.0
        %595 = vmatpush2.xpose.msra.mxu0 0.0
        %596 = vmatprep.subr.mxu0 0.0
        %597 = vmatpush2.xpose.msra.mxu0 0.0
        %598 = vmatprep.subr.mxu0 0.0
        %599 = vmatpush2.xpose.msra.mxu0 0.0
        %600 = vmatprep.subr.mxu0 0.0
        %601 = vmatpush2.xpose.msra.mxu0 0.0
        %602 = vmatprep.subr.mxu0 0.0
        %603 = vmatpush2.xpose.msra.mxu0 0.0
        %604 = vmatprep.mubr.f32.mxu0 0.0
        %605 = vmatmul.mubr.f32.gmra.mxu0 %v456
        %v606 = vpop.f32.mrf.mxu0
        %v607 = vadd.f32 %v453, %v606
        %v608 = vpop.f32.mrf.mxu0
        %609 = vdwg.mxu0
        %v611 = vsel %vm454, %v430, 0
        %v614 = vsel %vm454, %v431, 0
        %616 = vmatprep.subr.mxu0 0.0
        %617 = vmatpush1.xpose.msra.mxu0 0.0
        %618 = vmatprep.subr.mxu0 0.0
        %619 = vmatpush1.xpose.msra.mxu0 0.0
        %620 = vmatprep.subr.mxu0 0.0
        %621 = vmatpush1.xpose.msra.mxu0 0.0
        %622 = vmatprep.subr.mxu0 0.0
        %623 = vmatpush1.xpose.msra.mxu0 0.0
        %624 = vmatprep.subr.mxu0 0.0
        %625 = vmatpush1.xpose.msra.mxu0 0.0
        %626 = vmatprep.subr.mxu0 0.0
        %627 = vmatpush1.xpose.msra.mxu0 0.0
        %628 = vmatprep.subr.mxu0 0.0
        %629 = vmatpush1.xpose.msra.mxu0 0.0
        %630 = vmatprep.subr.mxu0 0.0
        %631 = vmatpush1.xpose.msra.mxu0 0.0
        %632 = vmatprep.subr.mxu0 0.0
        %633 = vmatpush1.xpose.msra.mxu0 0.0
        %634 = vmatprep.subr.mxu0 0.0
        %635 = vmatpush1.xpose.msra.mxu0 0.0
        %636 = vmatprep.subr.mxu0 0.0
        %637 = vmatpush1.xpose.msra.mxu0 0.0
        %638 = vmatprep.subr.mxu0 0.0
        %639 = vmatpush1.xpose.msra.mxu0 0.0
        %640 = vmatprep.subr.mxu0 0.0
        %641 = vmatpush1.xpose.msra.mxu0 0.0
        %642 = vmatprep.subr.mxu0 0.0
        %643 = vmatpush1.xpose.msra.mxu0 0.0
        %644 = vmatprep.subr.mxu0 0.0
        %645 = vmatpush1.xpose.msra.mxu0 %v614
        %646 = vmatprep.subr.mxu0 0.0
        %647 = vmatpush1.xpose.msra.mxu0 %v611
        %648 = vmatprep.subr.mxu0 0.0
        %649 = vmatpush2.xpose.msra.mxu0 0.0
        %650 = vmatprep.subr.mxu0 0.0
        %651 = vmatpush2.xpose.msra.mxu0 0.0
        %652 = vmatprep.subr.mxu0 0.0
        %653 = vmatpush2.xpose.msra.mxu0 0.0
        %654 = vmatprep.subr.mxu0 0.0
        %655 = vmatpush2.xpose.msra.mxu0 0.0
        %656 = vmatprep.subr.mxu0 0.0
        %657 = vmatpush2.xpose.msra.mxu0 0.0
        %658 = vmatprep.subr.mxu0 0.0
        %659 = vmatpush2.xpose.msra.mxu0 0.0
        %660 = vmatprep.subr.mxu0 0.0
        %661 = vmatpush2.xpose.msra.mxu0 0.0
        %662 = vmatprep.subr.mxu0 0.0
        %663 = vmatpush2.xpose.msra.mxu0 0.0
        %664 = vmatprep.subr.mxu0 0.0
        %665 = vmatpush2.xpose.msra.mxu0 0.0
        %666 = vmatprep.subr.mxu0 0.0
        %667 = vmatpush2.xpose.msra.mxu0 0.0
        %668 = vmatprep.subr.mxu0 0.0
        %669 = vmatpush2.xpose.msra.mxu0 0.0
        %670 = vmatprep.subr.mxu0 0.0
        %671 = vmatpush2.xpose.msra.mxu0 0.0
        %672 = vmatprep.subr.mxu0 0.0
        %673 = vmatpush2.xpose.msra.mxu0 0.0
        %674 = vmatprep.subr.mxu0 0.0
        %675 = vmatpush2.xpose.msra.mxu0 0.0
        %676 = vmatprep.subr.mxu0 0.0
        %677 = vmatpush2.xpose.msra.mxu0 0.0
        %678 = vmatprep.subr.mxu0 0.0
        %679 = vmatpush2.xpose.msra.mxu0 0.0
        %680 = vmatprep.mubr.f32.mxu0 0.0
        %681 = vmatmul.mubr.f32.gmra.mxu0 %v456
        %v682 = vpop.f32.mrf.mxu0
        %v683 = vadd.f32 %v453, %v682
        %v684 = vpop.f32.mrf.mxu0
        %685 = vdwg.mxu0
        %v687 = vsel %vm454, %v432, 0
        %v690 = vsel %vm454, %v433, 0
        %692 = vmatprep.subr.mxu0 0.0
        %693 = vmatpush1.xpose.msra.mxu0 0.0
        %694 = vmatprep.subr.mxu0 0.0
        %695 = vmatpush1.xpose.msra.mxu0 0.0
        %696 = vmatprep.subr.mxu0 0.0
        %697 = vmatpush1.xpose.msra.mxu0 0.0
        %698 = vmatprep.subr.mxu0 0.0
        %699 = vmatpush1.xpose.msra.mxu0 0.0
        %700 = vmatprep.subr.mxu0 0.0
        %701 = vmatpush1.xpose.msra.mxu0 0.0
        %702 = vmatprep.subr.mxu0 0.0
        %703 = vmatpush1.xpose.msra.mxu0 0.0
        %704 = vmatprep.subr.mxu0 0.0
        %705 = vmatpush1.xpose.msra.mxu0 0.0
        %706 = vmatprep.subr.mxu0 0.0
        %707 = vmatpush1.xpose.msra.mxu0 0.0
        %708 = vmatprep.subr.mxu0 0.0
        %709 = vmatpush1.xpose.msra.mxu0 0.0
        %710 = vmatprep.subr.mxu0 0.0
        %711 = vmatpush1.xpose.msra.mxu0 0.0
        %712 = vmatprep.subr.mxu0 0.0
        %713 = vmatpush1.xpose.msra.mxu0 0.0
        %714 = vmatprep.subr.mxu0 0.0
        %715 = vmatpush1.xpose.msra.mxu0 0.0
        %716 = vmatprep.subr.mxu0 0.0
        %717 = vmatpush1.xpose.msra.mxu0 0.0
        %718 = vmatprep.subr.mxu0 0.0
        %719 = vmatpush1.xpose.msra.mxu0 0.0
        %720 = vmatprep.subr.mxu0 0.0
        %721 = vmatpush1.xpose.msra.mxu0 %v690
        %722 = vmatprep.subr.mxu0 0.0
        %723 = vmatpush1.xpose.msra.mxu0 %v687
        %724 = vmatprep.subr.mxu0 0.0
        %725 = vmatpush2.xpose.msra.mxu0 0.0
        %726 = vmatprep.subr.mxu0 0.0
        %727 = vmatpush2.xpose.msra.mxu0 0.0
        %728 = vmatprep.subr.mxu0 0.0
        %729 = vmatpush2.xpose.msra.mxu0 0.0
        %730 = vmatprep.subr.mxu0 0.0
        %731 = vmatpush2.xpose.msra.mxu0 0.0
        %732 = vmatprep.subr.mxu0 0.0
        %733 = vmatpush2.xpose.msra.mxu0 0.0
        %734 = vmatprep.subr.mxu0 0.0
        %735 = vmatpush2.xpose.msra.mxu0 0.0
        %736 = vmatprep.subr.mxu0 0.0
        %737 = vmatpush2.xpose.msra.mxu0 0.0
        %738 = vmatprep.subr.mxu0 0.0
        %739 = vmatpush2.xpose.msra.mxu0 0.0
        %740 = vmatprep.subr.mxu0 0.0
        %741 = vmatpush2.xpose.msra.mxu0 0.0
        %742 = vmatprep.subr.mxu0 0.0
        %743 = vmatpush2.xpose.msra.mxu0 0.0
        %744 = vmatprep.subr.mxu0 0.0
        %745 = vmatpush2.xpose.msra.mxu0 0.0
        %746 = vmatprep.subr.mxu0 0.0
        %747 = vmatpush2.xpose.msra.mxu0 0.0
        %748 = vmatprep.subr.mxu0 0.0
        %749 = vmatpush2.xpose.msra.mxu0 0.0
        %750 = vmatprep.subr.mxu0 0.0
        %751 = vmatpush2.xpose.msra.mxu0 0.0
        %752 = vmatprep.subr.mxu0 0.0
        %753 = vmatpush2.xpose.msra.mxu0 0.0
        %754 = vmatprep.subr.mxu0 0.0
        %755 = vmatpush2.xpose.msra.mxu0 0.0
        %756 = vmatprep.mubr.f32.mxu0 0.0
        %757 = vmatmul.mubr.f32.gmra.mxu0 %v456
        %v758 = vpop.f32.mrf.mxu0
        %v759 = vadd.f32 %v453, %v758
        %v760 = vpop.f32.mrf.mxu0
        %761 = vdwg.mxu0
        %v763 = vsel %vm454, %v434, 0
        %v766 = vsel %vm454, %v435, 0
        %768 = vmatprep.subr.mxu0 0.0
        %769 = vmatpush1.xpose.msra.mxu0 0.0
        %770 = vmatprep.subr.mxu0 0.0
        %771 = vmatpush1.xpose.msra.mxu0 0.0
        %772 = vmatprep.subr.mxu0 0.0
        %773 = vmatpush1.xpose.msra.mxu0 0.0
        %774 = vmatprep.subr.mxu0 0.0
        %775 = vmatpush1.xpose.msra.mxu0 0.0
        %776 = vmatprep.subr.mxu0 0.0
        %777 = vmatpush1.xpose.msra.mxu0 0.0
        %778 = vmatprep.subr.mxu0 0.0
        %779 = vmatpush1.xpose.msra.mxu0 0.0
        %780 = vmatprep.subr.mxu0 0.0
        %781 = vmatpush1.xpose.msra.mxu0 0.0
        %782 = vmatprep.subr.mxu0 0.0
        %783 = vmatpush1.xpose.msra.mxu0 0.0
        %784 = vmatprep.subr.mxu0 0.0
        %785 = vmatpush1.xpose.msra.mxu0 0.0
        %786 = vmatprep.subr.mxu0 0.0
        %787 = vmatpush1.xpose.msra.mxu0 0.0
        %788 = vmatprep.subr.mxu0 0.0
        %789 = vmatpush1.xpose.msra.mxu0 0.0
        %790 = vmatprep.subr.mxu0 0.0
        %791 = vmatpush1.xpose.msra.mxu0 0.0
        %792 = vmatprep.subr.mxu0 0.0
        %793 = vmatpush1.xpose.msra.mxu0 0.0
        %794 = vmatprep.subr.mxu0 0.0
        %795 = vmatpush1.xpose.msra.mxu0 0.0
        %796 = vmatprep.subr.mxu0 0.0
        %797 = vmatpush1.xpose.msra.mxu0 %v766
        %798 = vmatprep.subr.mxu0 0.0
        %799 = vmatpush1.xpose.msra.mxu0 %v763
        %800 = vmatprep.subr.mxu0 0.0
        %801 = vmatpush2.xpose.msra.mxu0 0.0
        %802 = vmatprep.subr.mxu0 0.0
        %803 = vmatpush2.xpose.msra.mxu0 0.0
        %804 = vmatprep.subr.mxu0 0.0
        %805 = vmatpush2.xpose.msra.mxu0 0.0
        %806 = vmatprep.subr.mxu0 0.0
        %807 = vmatpush2.xpose.msra.mxu0 0.0
        %808 = vmatprep.subr.mxu0 0.0
        %809 = vmatpush2.xpose.msra.mxu0 0.0
        %810 = vmatprep.subr.mxu0 0.0
        %811 = vmatpush2.xpose.msra.mxu0 0.0
        %812 = vmatprep.subr.mxu0 0.0
        %813 = vmatpush2.xpose.msra.mxu0 0.0
        %814 = vmatprep.subr.mxu0 0.0
        %815 = vmatpush2.xpose.msra.mxu0 0.0
        %816 = vmatprep.subr.mxu0 0.0
        %817 = vmatpush2.xpose.msra.mxu0 0.0
        %818 = vmatprep.subr.mxu0 0.0
        %819 = vmatpush2.xpose.msra.mxu0 0.0
        %820 = vmatprep.subr.mxu0 0.0
        %821 = vmatpush2.xpose.msra.mxu0 0.0
        %822 = vmatprep.subr.mxu0 0.0
        %823 = vmatpush2.xpose.msra.mxu0 0.0
        %824 = vmatprep.subr.mxu0 0.0
        %825 = vmatpush2.xpose.msra.mxu0 0.0
        %826 = vmatprep.subr.mxu0 0.0
        %827 = vmatpush2.xpose.msra.mxu0 0.0
        %828 = vmatprep.subr.mxu0 0.0
        %829 = vmatpush2.xpose.msra.mxu0 0.0
        %830 = vmatprep.subr.mxu0 0.0
        %831 = vmatpush2.xpose.msra.mxu0 0.0
        %832 = vmatprep.mubr.f32.mxu0 0.0
        %833 = vmatmul.mubr.f32.gmra.mxu0 %v456
        %v834 = vpop.f32.mrf.mxu0
        %v835 = vadd.f32 %v453, %v834
        %v836 = vpop.f32.mrf.mxu0
        %837 = vdwg.mxu0
        %v839 = vsel %vm454, %v436, 0
        %v842 = vsel %vm454, %v437, 0
        %844 = vmatprep.subr.mxu0 0.0
        %845 = vmatpush1.xpose.msra.mxu0 0.0
        %846 = vmatprep.subr.mxu0 0.0
        %847 = vmatpush1.xpose.msra.mxu0 0.0
        %848 = vmatprep.subr.mxu0 0.0
        %849 = vmatpush1.xpose.msra.mxu0 0.0
        %850 = vmatprep.subr.mxu0 0.0
        %851 = vmatpush1.xpose.msra.mxu0 0.0
        %852 = vmatprep.subr.mxu0 0.0
        %853 = vmatpush1.xpose.msra.mxu0 0.0
        %854 = vmatprep.subr.mxu0 0.0
        %855 = vmatpush1.xpose.msra.mxu0 0.0
        %856 = vmatprep.subr.mxu0 0.0
        %857 = vmatpush1.xpose.msra.mxu0 0.0
        %858 = vmatprep.subr.mxu0 0.0
        %859 = vmatpush1.xpose.msra.mxu0 0.0
        %860 = vmatprep.subr.mxu0 0.0
        %861 = vmatpush1.xpose.msra.mxu0 0.0
        %862 = vmatprep.subr.mxu0 0.0
        %863 = vmatpush1.xpose.msra.mxu0 0.0
        %864 = vmatprep.subr.mxu0 0.0
        %865 = vmatpush1.xpose.msra.mxu0 0.0
        %866 = vmatprep.subr.mxu0 0.0
        %867 = vmatpush1.xpose.msra.mxu0 0.0
        %868 = vmatprep.subr.mxu0 0.0
        %869 = vmatpush1.xpose.msra.mxu0 0.0
        %870 = vmatprep.subr.mxu0 0.0
        %871 = vmatpush1.xpose.msra.mxu0 0.0
        %872 = vmatprep.subr.mxu0 0.0
        %873 = vmatpush1.xpose.msra.mxu0 %v842
        %874 = vmatprep.subr.mxu0 0.0
        %875 = vmatpush1.xpose.msra.mxu0 %v839
        %876 = vmatprep.subr.mxu0 0.0
        %877 = vmatpush2.xpose.msra.mxu0 0.0
        %878 = vmatprep.subr.mxu0 0.0
        %879 = vmatpush2.xpose.msra.mxu0 0.0
        %880 = vmatprep.subr.mxu0 0.0
        %881 = vmatpush2.xpose.msra.mxu0 0.0
        %882 = vmatprep.subr.mxu0 0.0
        %883 = vmatpush2.xpose.msra.mxu0 0.0
        %884 = vmatprep.subr.mxu0 0.0
        %885 = vmatpush2.xpose.msra.mxu0 0.0
        %886 = vmatprep.subr.mxu0 0.0
        %887 = vmatpush2.xpose.msra.mxu0 0.0
        %888 = vmatprep.subr.mxu0 0.0
        %889 = vmatpush2.xpose.msra.mxu0 0.0
        %890 = vmatprep.subr.mxu0 0.0
        %891 = vmatpush2.xpose.msra.mxu0 0.0
        %892 = vmatprep.subr.mxu0 0.0
        %893 = vmatpush2.xpose.msra.mxu0 0.0
        %894 = vmatprep.subr.mxu0 0.0
        %895 = vmatpush2.xpose.msra.mxu0 0.0
        %896 = vmatprep.subr.mxu0 0.0
        %897 = vmatpush2.xpose.msra.mxu0 0.0
        %898 = vmatprep.subr.mxu0 0.0
        %899 = vmatpush2.xpose.msra.mxu0 0.0
        %900 = vmatprep.subr.mxu0 0.0
        %901 = vmatpush2.xpose.msra.mxu0 0.0
        %902 = vmatprep.subr.mxu0 0.0
        %903 = vmatpush2.xpose.msra.mxu0 0.0
        %904 = vmatprep.subr.mxu0 0.0
        %905 = vmatpush2.xpose.msra.mxu0 0.0
        %906 = vmatprep.subr.mxu0 0.0
        %907 = vmatpush2.xpose.msra.mxu0 0.0
        %908 = vmatprep.mubr.f32.mxu0 0.0
        %909 = vmatmul.mubr.f32.gmra.mxu0 %v456
        %v910 = vpop.f32.mrf.mxu0
        %v911 = vadd.f32 %v453, %v910
        %v912 = vpop.f32.mrf.mxu0
        %913 = vdwg.mxu0
        %v915 = vsel %vm454, %v438, 0
        %v918 = vsel %vm454, %v439, 0
        %920 = vmatprep.subr.mxu0 0.0
        %921 = vmatpush1.xpose.msra.mxu0 0.0
        %922 = vmatprep.subr.mxu0 0.0
        %923 = vmatpush1.xpose.msra.mxu0 0.0
        %924 = vmatprep.subr.mxu0 0.0
        %925 = vmatpush1.xpose.msra.mxu0 0.0
        %926 = vmatprep.subr.mxu0 0.0
        %927 = vmatpush1.xpose.msra.mxu0 0.0
        %928 = vmatprep.subr.mxu0 0.0
        %929 = vmatpush1.xpose.msra.mxu0 0.0
        %930 = vmatprep.subr.mxu0 0.0
        %931 = vmatpush1.xpose.msra.mxu0 0.0
        %932 = vmatprep.subr.mxu0 0.0
        %933 = vmatpush1.xpose.msra.mxu0 0.0
        %934 = vmatprep.subr.mxu0 0.0
        %935 = vmatpush1.xpose.msra.mxu0 0.0
        %936 = vmatprep.subr.mxu0 0.0
        %937 = vmatpush1.xpose.msra.mxu0 0.0
        %938 = vmatprep.subr.mxu0 0.0
        %939 = vmatpush1.xpose.msra.mxu0 0.0
        %940 = vmatprep.subr.mxu0 0.0
        %941 = vmatpush1.xpose.msra.mxu0 0.0
        %942 = vmatprep.subr.mxu0 0.0
        %943 = vmatpush1.xpose.msra.mxu0 0.0
        %944 = vmatprep.subr.mxu0 0.0
        %945 = vmatpush1.xpose.msra.mxu0 0.0
        %946 = vmatprep.subr.mxu0 0.0
        %947 = vmatpush1.xpose.msra.mxu0 0.0
        %948 = vmatprep.subr.mxu0 0.0
        %949 = vmatpush1.xpose.msra.mxu0 %v918
        %950 = vmatprep.subr.mxu0 0.0
        %951 = vmatpush1.xpose.msra.mxu0 %v915
        %952 = vmatprep.subr.mxu0 0.0
        %953 = vmatpush2.xpose.msra.mxu0 0.0
        %954 = vmatprep.subr.mxu0 0.0
        %955 = vmatpush2.xpose.msra.mxu0 0.0
        %956 = vmatprep.subr.mxu0 0.0
        %957 = vmatpush2.xpose.msra.mxu0 0.0
        %958 = vmatprep.subr.mxu0 0.0
        %959 = vmatpush2.xpose.msra.mxu0 0.0
        %960 = vmatprep.subr.mxu0 0.0
        %961 = vmatpush2.xpose.msra.mxu0 0.0
        %962 = vmatprep.subr.mxu0 0.0
        %963 = vmatpush2.xpose.msra.mxu0 0.0
        %964 = vmatprep.subr.mxu0 0.0
        %965 = vmatpush2.xpose.msra.mxu0 0.0
        %966 = vmatprep.subr.mxu0 0.0
        %967 = vmatpush2.xpose.msra.mxu0 0.0
        %968 = vmatprep.subr.mxu0 0.0
        %969 = vmatpush2.xpose.msra.mxu0 0.0
        %970 = vmatprep.subr.mxu0 0.0
        %971 = vmatpush2.xpose.msra.mxu0 0.0
        %972 = vmatprep.subr.mxu0 0.0
        %973 = vmatpush2.xpose.msra.mxu0 0.0
        %974 = vmatprep.subr.mxu0 0.0
        %975 = vmatpush2.xpose.msra.mxu0 0.0
        %976 = vmatprep.subr.mxu0 0.0
        %977 = vmatpush2.xpose.msra.mxu0 0.0
        %978 = vmatprep.subr.mxu0 0.0
        %979 = vmatpush2.xpose.msra.mxu0 0.0
        %980 = vmatprep.subr.mxu0 0.0
        %981 = vmatpush2.xpose.msra.mxu0 0.0
        %982 = vmatprep.subr.mxu0 0.0
        %983 = vmatpush2.xpose.msra.mxu0 0.0
        %984 = vmatprep.mubr.f32.mxu0 0.0
        %985 = vmatmul.mubr.f32.gmra.mxu0 %v456
        %v986 = vpop.f32.mrf.mxu0
        %v987 = vadd.f32 %v453, %v986
        %v988 = vpop.f32.mrf.mxu0
        %989 = vdwg.mxu0
        %v991 = vsel %vm454, %v440, 0
        %v994 = vsel %vm454, %v441, 0
        %996 = vmatprep.subr.mxu0 0.0
        %997 = vmatpush1.xpose.msra.mxu0 0.0
        %998 = vmatprep.subr.mxu0 0.0
        %999 = vmatpush1.xpose.msra.mxu0 0.0
        %1000 = vmatprep.subr.mxu0 0.0
        %1001 = vmatpush1.xpose.msra.mxu0 0.0
        %1002 = vmatprep.subr.mxu0 0.0
        %1003 = vmatpush1.xpose.msra.mxu0 0.0
        %1004 = vmatprep.subr.mxu0 0.0
        %1005 = vmatpush1.xpose.msra.mxu0 0.0
        %1006 = vmatprep.subr.mxu0 0.0
        %1007 = vmatpush1.xpose.msra.mxu0 0.0
        %1008 = vmatprep.subr.mxu0 0.0
        %1009 = vmatpush1.xpose.msra.mxu0 0.0
        %1010 = vmatprep.subr.mxu0 0.0
        %1011 = vmatpush1.xpose.msra.mxu0 0.0
        %1012 = vmatprep.subr.mxu0 0.0
        %1013 = vmatpush1.xpose.msra.mxu0 0.0
        %1014 = vmatprep.subr.mxu0 0.0
        %1015 = vmatpush1.xpose.msra.mxu0 0.0
        %1016 = vmatprep.subr.mxu0 0.0
        %1017 = vmatpush1.xpose.msra.mxu0 0.0
        %1018 = vmatprep.subr.mxu0 0.0
        %1019 = vmatpush1.xpose.msra.mxu0 0.0
        %1020 = vmatprep.subr.mxu0 0.0
        %1021 = vmatpush1.xpose.msra.mxu0 0.0
        %1022 = vmatprep.subr.mxu0 0.0
        %1023 = vmatpush1.xpose.msra.mxu0 0.0
        %1024 = vmatprep.subr.mxu0 0.0
        %1025 = vmatpush1.xpose.msra.mxu0 %v994
        %1026 = vmatprep.subr.mxu0 0.0
        %1027 = vmatpush1.xpose.msra.mxu0 %v991
        %1028 = vmatprep.subr.mxu0 0.0
        %1029 = vmatpush2.xpose.msra.mxu0 0.0
        %1030 = vmatprep.subr.mxu0 0.0
        %1031 = vmatpush2.xpose.msra.mxu0 0.0
        %1032 = vmatprep.subr.mxu0 0.0
        %1033 = vmatpush2.xpose.msra.mxu0 0.0
        %1034 = vmatprep.subr.mxu0 0.0
        %1035 = vmatpush2.xpose.msra.mxu0 0.0
        %1036 = vmatprep.subr.mxu0 0.0
        %1037 = vmatpush2.xpose.msra.mxu0 0.0
        %1038 = vmatprep.subr.mxu0 0.0
        %1039 = vmatpush2.xpose.msra.mxu0 0.0
        %1040 = vmatprep.subr.mxu0 0.0
        %1041 = vmatpush2.xpose.msra.mxu0 0.0
        %1042 = vmatprep.subr.mxu0 0.0
        %1043 = vmatpush2.xpose.msra.mxu0 0.0
        %1044 = vmatprep.subr.mxu0 0.0
        %1045 = vmatpush2.xpose.msra.mxu0 0.0
        %1046 = vmatprep.subr.mxu0 0.0
        %1047 = vmatpush2.xpose.msra.mxu0 0.0
        %1048 = vmatprep.subr.mxu0 0.0
        %1049 = vmatpush2.xpose.msra.mxu0 0.0
        %1050 = vmatprep.subr.mxu0 0.0
        %1051 = vmatpush2.xpose.msra.mxu0 0.0
        %1052 = vmatprep.subr.mxu0 0.0
        %1053 = vmatpush2.xpose.msra.mxu0 0.0
        %1054 = vmatprep.subr.mxu0 0.0
        %1055 = vmatpush2.xpose.msra.mxu0 0.0
        %1056 = vmatprep.subr.mxu0 0.0
        %1057 = vmatpush2.xpose.msra.mxu0 0.0
        %1058 = vmatprep.subr.mxu0 0.0
        %1059 = vmatpush2.xpose.msra.mxu0 0.0
        %1060 = vmatprep.mubr.f32.mxu0 0.0
        %1061 = vmatmul.mubr.f32.gmra.mxu0 %v456
        %v1062 = vpop.f32.mrf.mxu0
        %v1063 = vadd.f32 %v453, %v1062
        %v1064 = vpop.f32.mrf.mxu0
        %1065 = vdwg.mxu0
        %v1066 = vstv %s451
        %v1067 = vmul.f32 %v531, %v1066
        %v1068 = vmul.f32 %v607, %v1066
        %v1069 = vmul.f32 %v683, %v1066
        %v1070 = vmul.f32 %v759, %v1066
        %v1071 = vmul.f32 %v835, %v1066
        %v1072 = vmul.f32 %v911, %v1066
        %v1073 = vmul.f32 %v987, %v1066
        %v1074 = vmul.f32 %v1063, %v1066
        %vm1075 = vcmp.eq.f32.partialorder %v442, 0.0
        %vm1076 = vcmp.eq.f32.partialorder %v443, 0.0
        %vm1077 = vcmp.eq.f32.partialorder %v444, 0.0
        %vm1078 = vcmp.eq.f32.partialorder %v445, 0.0
        %vm1079 = vcmp.eq.f32.partialorder %v446, 0.0
        %vm1080 = vcmp.eq.f32.partialorder %v447, 0.0
        %vm1081 = vcmp.eq.f32.partialorder %v448, 0.0
        %vm1082 = vcmp.eq.f32.partialorder %v449, 0.0
        %v1083 = vsel %vm1075, -1e+09, %v1067
        %v1084 = vsel %vm1076, -1e+09, %v1068
        %v1085 = vsel %vm1077, -1e+09, %v1069
        %v1086 = vsel %vm1078, -1e+09, %v1070
        %v1087 = vsel %vm1079, -1e+09, %v1071
        %v1088 = vsel %vm1080, -1e+09, %v1072
        %v1089 = vsel %vm1081, -1e+09, %v1073
        %v1090 = vsel %vm1082, -1e+09, %v1074
        %vm1091 = vcmask 122880
        %v1092 = vsel %vm1091, %v1083, -inf
        %1093 = vmax.xlane.f32.xlu0 %v1092
        %v1094 = vpop.xlane.xlu0 %1093
        %v1095 = vsel %vm1091, %v1084, -inf
        %1096 = vmax.xlane.f32.xlu0 %v1095
        %v1097 = vpop.xlane.xlu0 %1096
        %v1098 = vsel %vm1091, %v1085, -inf
        %1099 = vmax.xlane.f32.xlu0 %v1098
        %v1100 = vpop.xlane.xlu0 %1099
        %v1101 = vsel %vm1091, %v1086, -inf
        %1102 = vmax.xlane.f32.xlu0 %v1101
        %v1103 = vpop.xlane.xlu0 %1102
        %v1104 = vsel %vm1091, %v1087, -inf
        %1105 = vmax.xlane.f32.xlu0 %v1104
        %v1106 = vpop.xlane.xlu0 %1105
        %v1107 = vsel %vm1091, %v1088, -inf
        %1108 = vmax.xlane.f32.xlu0 %v1107
        %v1109 = vpop.xlane.xlu0 %1108
        %v1110 = vsel %vm1091, %v1089, -inf
        %1111 = vmax.xlane.f32.xlu0 %v1110
        %v1112 = vpop.xlane.xlu0 %1111
        %v1113 = vsel %vm1091, %v1090, -inf
        %1114 = vmax.xlane.f32.xlu0 %v1113
        %v1115 = vpop.xlane.xlu0 %1114
        %v1116 = vsub.f32 %v1083, %v1094
        %v1117 = vsub.f32 %v1084, %v1097
        %v1118 = vsub.f32 %v1085, %v1100
        %v1119 = vsub.f32 %v1086, %v1103
        %v1120 = vsub.f32 %v1087, %v1106
        %v1121 = vsub.f32 %v1088, %v1109
        %v1122 = vsub.f32 %v1089, %v1112
        %v1123 = vsub.f32 %v1090, %v1115
        %v1124 = vmul.f32 %v1116, 1.442695
        %v1125 = vpow.pop %v1124
        %v1126 = vmul.f32 %v1117, 1.442695
        %v1127 = vpow.pop %v1126
        %v1128 = vmul.f32 %v1118, 1.442695
        %v1129 = vpow.pop %v1128
        %v1130 = vmul.f32 %v1119, 1.442695
        %v1131 = vpow.pop %v1130
        %v1132 = vmul.f32 %v1120, 1.442695
        %v1133 = vpow.pop %v1132
        %v1134 = vmul.f32 %v1121, 1.442695
        %v1135 = vpow.pop %v1134
        %v1136 = vmul.f32 %v1122, 1.442695
        %v1137 = vpow.pop %v1136
        %v1138 = vmul.f32 %v1123, 1.442695
        %v1139 = vpow.pop %v1138
        %v1140 = vsel %vm1091, %v1125, 0.0
        %1141 = vadd.xlane.f32.xlu0 %v1140
        %v1142 = vpop.xlane.xlu0 %1141
        %v1143 = vsel %vm1091, %v1127, 0.0
        %1144 = vadd.xlane.f32.xlu0 %v1143
        %v1145 = vpop.xlane.xlu0 %1144
        %v1146 = vsel %vm1091, %v1129, 0.0
        %1147 = vadd.xlane.f32.xlu0 %v1146
        %v1148 = vpop.xlane.xlu0 %1147
        %v1149 = vsel %vm1091, %v1131, 0.0
        %1150 = vadd.xlane.f32.xlu0 %v1149
        %v1151 = vpop.xlane.xlu0 %1150
        %v1152 = vsel %vm1091, %v1133, 0.0
        %1153 = vadd.xlane.f32.xlu0 %v1152
        %v1154 = vpop.xlane.xlu0 %1153
        %v1155 = vsel %vm1091, %v1135, 0.0
        %1156 = vadd.xlane.f32.xlu0 %v1155
        %v1157 = vpop.xlane.xlu0 %1156
        %v1158 = vsel %vm1091, %v1137, 0.0
        %1159 = vadd.xlane.f32.xlu0 %v1158
        %v1160 = vpop.xlane.xlu0 %1159
        %v1161 = vsel %vm1091, %v1139, 0.0
        %1162 = vadd.xlane.f32.xlu0 %v1161
        %v1163 = vpop.xlane.xlu0 %1162
        %v1164 = vrcp.pop %v1142
        %v1165 = vrcp.pop %v1145
        %v1166 = vrcp.pop %v1148
        %v1167 = vrcp.pop %v1151
        %v1168 = vrcp.pop %v1154
        %v1169 = vrcp.pop %v1157
        %v1170 = vrcp.pop %v1160
        %v1171 = vrcp.pop %v1163
        %v1172 = vmul.f32 %v1125, %v1164
        %v1173 = vmul.f32 %v1127, %v1165
        %v1174 = vmul.f32 %v1129, %v1166
        %v1175 = vmul.f32 %v1131, %v1167
        %v1176 = vmul.f32 %v1133, %v1168
        %v1177 = vmul.f32 %v1135, %v1169
        %v1178 = vmul.f32 %v1137, %v1170
        %v1179 = vmul.f32 %v1139, %v1171
        %vm1180 = vcmask 130048
        %v1182 = vsel %vm1180, %v1172, 0
        %1184 = vmatprep.subr.mxu0 0.0
        %1185 = vmatpush1.msra.mxu0 0.0
        %1186 = vmatprep.subr.mxu0 0.0
        %1187 = vmatpush1.msra.mxu0 0.0
        %1188 = vmatprep.subr.mxu0 0.0
        %1189 = vmatpush1.msra.mxu0 0.0
        %1190 = vmatprep.subr.mxu0 0.0
        %1191 = vmatpush1.msra.mxu0 0.0
        %1192 = vmatprep.subr.mxu0 0.0
        %1193 = vmatpush1.msra.mxu0 0.0
        %1194 = vmatprep.subr.mxu0 0.0
        %1195 = vmatpush1.msra.mxu0 0.0
        %1196 = vmatprep.subr.mxu0 0.0
        %1197 = vmatpush1.msra.mxu0 0.0
        %1198 = vmatprep.subr.mxu0 0.0
        %1199 = vmatpush1.msra.mxu0 0.0
        %1200 = vmatprep.subr.mxu0 0.0
        %1201 = vmatpush1.msra.mxu0 0.0
        %1202 = vmatprep.subr.mxu0 0.0
        %1203 = vmatpush1.msra.mxu0 0.0
        %1204 = vmatprep.subr.mxu0 0.0
        %1205 = vmatpush1.msra.mxu0 0.0
        %1206 = vmatprep.subr.mxu0 0.0
        %1207 = vmatpush1.msra.mxu0 0.0
        %1208 = vmatprep.subr.mxu0 0.0
        %1209 = vmatpush1.msra.mxu0 0.0
        %1210 = vmatprep.subr.mxu0 0.0
        %1211 = vmatpush1.msra.mxu0 0.0
        %1212 = vmatprep.subr.mxu0 0.0
        %1213 = vmatpush1.msra.mxu0 %v427
        %1214 = vmatprep.subr.mxu0 0.0
        %1215 = vmatpush1.msra.mxu0 %v426
        %1216 = vmatprep.subr.mxu0 0.0
        %1217 = vmatpush2.msra.mxu0 0.0
        %1218 = vmatprep.subr.mxu0 0.0
        %1219 = vmatpush2.msra.mxu0 0.0
        %1220 = vmatprep.subr.mxu0 0.0
        %1221 = vmatpush2.msra.mxu0 0.0
        %1222 = vmatprep.subr.mxu0 0.0
        %1223 = vmatpush2.msra.mxu0 0.0
        %1224 = vmatprep.subr.mxu0 0.0
        %1225 = vmatpush2.msra.mxu0 0.0
        %1226 = vmatprep.subr.mxu0 0.0
        %1227 = vmatpush2.msra.mxu0 0.0
        %1228 = vmatprep.subr.mxu0 0.0
        %1229 = vmatpush2.msra.mxu0 0.0
        %1230 = vmatprep.subr.mxu0 0.0
        %1231 = vmatpush2.msra.mxu0 0.0
        %1232 = vmatprep.subr.mxu0 0.0
        %1233 = vmatpush2.msra.mxu0 0.0
        %1234 = vmatprep.subr.mxu0 0.0
        %1235 = vmatpush2.msra.mxu0 0.0
        %1236 = vmatprep.subr.mxu0 0.0
        %1237 = vmatpush2.msra.mxu0 0.0
        %1238 = vmatprep.subr.mxu0 0.0
        %1239 = vmatpush2.msra.mxu0 0.0
        %1240 = vmatprep.subr.mxu0 0.0
        %1241 = vmatpush2.msra.mxu0 0.0
        %1242 = vmatprep.subr.mxu0 0.0
        %1243 = vmatpush2.msra.mxu0 0.0
        %1244 = vmatprep.subr.mxu0 0.0
        %1245 = vmatpush2.msra.mxu0 0.0
        %1246 = vmatprep.subr.mxu0 0.0
        %1247 = vmatpush2.msra.mxu0 0.0
        %1248 = vmatprep.mubr.f32.mxu0 0.0
        %1249 = vmatmul.mubr.f32.gmra.mxu0 %v1182
        %v1250 = vpop.f32.mrf.mxu0
        %v1251 = vadd.f32 %v426, %v1250
        %v1252 = vpop.f32.mrf.mxu0
        %1253 = vdwg.mxu0
        %v1255 = vsel %vm1180, %v1173, 0
        %1257 = vmatprep.subr.mxu0 0.0
        %1258 = vmatpush1.msra.mxu0 0.0
        %1259 = vmatprep.subr.mxu0 0.0
        %1260 = vmatpush1.msra.mxu0 0.0
        %1261 = vmatprep.subr.mxu0 0.0
        %1262 = vmatpush1.msra.mxu0 0.0
        %1263 = vmatprep.subr.mxu0 0.0
        %1264 = vmatpush1.msra.mxu0 0.0
        %1265 = vmatprep.subr.mxu0 0.0
        %1266 = vmatpush1.msra.mxu0 0.0
        %1267 = vmatprep.subr.mxu0 0.0
        %1268 = vmatpush1.msra.mxu0 0.0
        %1269 = vmatprep.subr.mxu0 0.0
        %1270 = vmatpush1.msra.mxu0 0.0
        %1271 = vmatprep.subr.mxu0 0.0
        %1272 = vmatpush1.msra.mxu0 0.0
        %1273 = vmatprep.subr.mxu0 0.0
        %1274 = vmatpush1.msra.mxu0 0.0
        %1275 = vmatprep.subr.mxu0 0.0
        %1276 = vmatpush1.msra.mxu0 0.0
        %1277 = vmatprep.subr.mxu0 0.0
        %1278 = vmatpush1.msra.mxu0 0.0
        %1279 = vmatprep.subr.mxu0 0.0
        %1280 = vmatpush1.msra.mxu0 0.0
        %1281 = vmatprep.subr.mxu0 0.0
        %1282 = vmatpush1.msra.mxu0 0.0
        %1283 = vmatprep.subr.mxu0 0.0
        %1284 = vmatpush1.msra.mxu0 0.0
        %1285 = vmatprep.subr.mxu0 0.0
        %1286 = vmatpush1.msra.mxu0 %v429
        %1287 = vmatprep.subr.mxu0 0.0
        %1288 = vmatpush1.msra.mxu0 %v428
        %1289 = vmatprep.subr.mxu0 0.0
        %1290 = vmatpush2.msra.mxu0 0.0
        %1291 = vmatprep.subr.mxu0 0.0
        %1292 = vmatpush2.msra.mxu0 0.0
        %1293 = vmatprep.subr.mxu0 0.0
        %1294 = vmatpush2.msra.mxu0 0.0
        %1295 = vmatprep.subr.mxu0 0.0
        %1296 = vmatpush2.msra.mxu0 0.0
        %1297 = vmatprep.subr.mxu0 0.0
        %1298 = vmatpush2.msra.mxu0 0.0
        %1299 = vmatprep.subr.mxu0 0.0
        %1300 = vmatpush2.msra.mxu0 0.0
        %1301 = vmatprep.subr.mxu0 0.0
        %1302 = vmatpush2.msra.mxu0 0.0
        %1303 = vmatprep.subr.mxu0 0.0
        %1304 = vmatpush2.msra.mxu0 0.0
        %1305 = vmatprep.subr.mxu0 0.0
        %1306 = vmatpush2.msra.mxu0 0.0
        %1307 = vmatprep.subr.mxu0 0.0
        %1308 = vmatpush2.msra.mxu0 0.0
        %1309 = vmatprep.subr.mxu0 0.0
        %1310 = vmatpush2.msra.mxu0 0.0
        %1311 = vmatprep.subr.mxu0 0.0
        %1312 = vmatpush2.msra.mxu0 0.0
        %1313 = vmatprep.subr.mxu0 0.0
        %1314 = vmatpush2.msra.mxu0 0.0
        %1315 = vmatprep.subr.mxu0 0.0
        %1316 = vmatpush2.msra.mxu0 0.0
        %1317 = vmatprep.subr.mxu0 0.0
        %1318 = vmatpush2.msra.mxu0 0.0
        %1319 = vmatprep.subr.mxu0 0.0
        %1320 = vmatpush2.msra.mxu0 0.0
        %1321 = vmatprep.mubr.f32.mxu0 0.0
        %1322 = vmatmul.mubr.f32.gmra.mxu0 %v1255
        %v1323 = vpop.f32.mrf.mxu0
        %v1324 = vadd.f32 %v428, %v1323
        %v1325 = vpop.f32.mrf.mxu0
        %1326 = vdwg.mxu0
        %v1328 = vsel %vm1180, %v1174, 0
        %1330 = vmatprep.subr.mxu0 0.0
        %1331 = vmatpush1.msra.mxu0 0.0
        %1332 = vmatprep.subr.mxu0 0.0
        %1333 = vmatpush1.msra.mxu0 0.0
        %1334 = vmatprep.subr.mxu0 0.0
        %1335 = vmatpush1.msra.mxu0 0.0
        %1336 = vmatprep.subr.mxu0 0.0
        %1337 = vmatpush1.msra.mxu0 0.0
        %1338 = vmatprep.subr.mxu0 0.0
        %1339 = vmatpush1.msra.mxu0 0.0
        %1340 = vmatprep.subr.mxu0 0.0
        %1341 = vmatpush1.msra.mxu0 0.0
        %1342 = vmatprep.subr.mxu0 0.0
        %1343 = vmatpush1.msra.mxu0 0.0
        %1344 = vmatprep.subr.mxu0 0.0
        %1345 = vmatpush1.msra.mxu0 0.0
        %1346 = vmatprep.subr.mxu0 0.0
        %1347 = vmatpush1.msra.mxu0 0.0
        %1348 = vmatprep.subr.mxu0 0.0
        %1349 = vmatpush1.msra.mxu0 0.0
        %1350 = vmatprep.subr.mxu0 0.0
        %1351 = vmatpush1.msra.mxu0 0.0
        %1352 = vmatprep.subr.mxu0 0.0
        %1353 = vmatpush1.msra.mxu0 0.0
        %1354 = vmatprep.subr.mxu0 0.0
        %1355 = vmatpush1.msra.mxu0 0.0
        %1356 = vmatprep.subr.mxu0 0.0
        %1357 = vmatpush1.msra.mxu0 0.0
        %1358 = vmatprep.subr.mxu0 0.0
        %1359 = vmatpush1.msra.mxu0 %v431
        %1360 = vmatprep.subr.mxu0 0.0
        %1361 = vmatpush1.msra.mxu0 %v430
        %1362 = vmatprep.subr.mxu0 0.0
        %1363 = vmatpush2.msra.mxu0 0.0
        %1364 = vmatprep.subr.mxu0 0.0
        %1365 = vmatpush2.msra.mxu0 0.0
        %1366 = vmatprep.subr.mxu0 0.0
        %1367 = vmatpush2.msra.mxu0 0.0
        %1368 = vmatprep.subr.mxu0 0.0
        %1369 = vmatpush2.msra.mxu0 0.0
        %1370 = vmatprep.subr.mxu0 0.0
        %1371 = vmatpush2.msra.mxu0 0.0
        %1372 = vmatprep.subr.mxu0 0.0
        %1373 = vmatpush2.msra.mxu0 0.0
        %1374 = vmatprep.subr.mxu0 0.0
        %1375 = vmatpush2.msra.mxu0 0.0
        %1376 = vmatprep.subr.mxu0 0.0
        %1377 = vmatpush2.msra.mxu0 0.0
        %1378 = vmatprep.subr.mxu0 0.0
        %1379 = vmatpush2.msra.mxu0 0.0
        %1380 = vmatprep.subr.mxu0 0.0
        %1381 = vmatpush2.msra.mxu0 0.0
        %1382 = vmatprep.subr.mxu0 0.0
        %1383 = vmatpush2.msra.mxu0 0.0
        %1384 = vmatprep.subr.mxu0 0.0
        %1385 = vmatpush2.msra.mxu0 0.0
        %1386 = vmatprep.subr.mxu0 0.0
        %1387 = vmatpush2.msra.mxu0 0.0
        %1388 = vmatprep.subr.mxu0 0.0
        %1389 = vmatpush2.msra.mxu0 0.0
        %1390 = vmatprep.subr.mxu0 0.0
        %1391 = vmatpush2.msra.mxu0 0.0
        %1392 = vmatprep.subr.mxu0 0.0
        %1393 = vmatpush2.msra.mxu0 0.0
        %1394 = vmatprep.mubr.f32.mxu0 0.0
        %1395 = vmatmul.mubr.f32.gmra.mxu0 %v1328
        %v1396 = vpop.f32.mrf.mxu0
        %v1397 = vadd.f32 %v430, %v1396
        %v1398 = vpop.f32.mrf.mxu0
        %1399 = vdwg.mxu0
        %v1401 = vsel %vm1180, %v1175, 0
        %1403 = vmatprep.subr.mxu0 0.0
        %1404 = vmatpush1.msra.mxu0 0.0
        %1405 = vmatprep.subr.mxu0 0.0
        %1406 = vmatpush1.msra.mxu0 0.0
        %1407 = vmatprep.subr.mxu0 0.0
        %1408 = vmatpush1.msra.mxu0 0.0
        %1409 = vmatprep.subr.mxu0 0.0
        %1410 = vmatpush1.msra.mxu0 0.0
        %1411 = vmatprep.subr.mxu0 0.0
        %1412 = vmatpush1.msra.mxu0 0.0
        %1413 = vmatprep.subr.mxu0 0.0
        %1414 = vmatpush1.msra.mxu0 0.0
        %1415 = vmatprep.subr.mxu0 0.0
        %1416 = vmatpush1.msra.mxu0 0.0
        %1417 = vmatprep.subr.mxu0 0.0
        %1418 = vmatpush1.msra.mxu0 0.0
        %1419 = vmatprep.subr.mxu0 0.0
        %1420 = vmatpush1.msra.mxu0 0.0
        %1421 = vmatprep.subr.mxu0 0.0
        %1422 = vmatpush1.msra.mxu0 0.0
        %1423 = vmatprep.subr.mxu0 0.0
        %1424 = vmatpush1.msra.mxu0 0.0
        %1425 = vmatprep.subr.mxu0 0.0
        %1426 = vmatpush1.msra.mxu0 0.0
        %1427 = vmatprep.subr.mxu0 0.0
        %1428 = vmatpush1.msra.mxu0 0.0
        %1429 = vmatprep.subr.mxu0 0.0
        %1430 = vmatpush1.msra.mxu0 0.0
        %1431 = vmatprep.subr.mxu0 0.0
        %1432 = vmatpush1.msra.mxu0 %v433
        %1433 = vmatprep.subr.mxu0 0.0
        %1434 = vmatpush1.msra.mxu0 %v432
        %1435 = vmatprep.subr.mxu0 0.0
        %1436 = vmatpush2.msra.mxu0 0.0
        %1437 = vmatprep.subr.mxu0 0.0
        %1438 = vmatpush2.msra.mxu0 0.0
        %1439 = vmatprep.subr.mxu0 0.0
        %1440 = vmatpush2.msra.mxu0 0.0
        %1441 = vmatprep.subr.mxu0 0.0
        %1442 = vmatpush2.msra.mxu0 0.0
        %1443 = vmatprep.subr.mxu0 0.0
        %1444 = vmatpush2.msra.mxu0 0.0
        %1445 = vmatprep.subr.mxu0 0.0
        %1446 = vmatpush2.msra.mxu0 0.0
        %1447 = vmatprep.subr.mxu0 0.0
        %1448 = vmatpush2.msra.mxu0 0.0
        %1449 = vmatprep.subr.mxu0 0.0
        %1450 = vmatpush2.msra.mxu0 0.0
        %1451 = vmatprep.subr.mxu0 0.0
        %1452 = vmatpush2.msra.mxu0 0.0
        %1453 = vmatprep.subr.mxu0 0.0
        %1454 = vmatpush2.msra.mxu0 0.0
        %1455 = vmatprep.subr.mxu0 0.0
        %1456 = vmatpush2.msra.mxu0 0.0
        %1457 = vmatprep.subr.mxu0 0.0
        %1458 = vmatpush2.msra.mxu0 0.0
        %1459 = vmatprep.subr.mxu0 0.0
        %1460 = vmatpush2.msra.mxu0 0.0
        %1461 = vmatprep.subr.mxu0 0.0
        %1462 = vmatpush2.msra.mxu0 0.0
        %1463 = vmatprep.subr.mxu0 0.0
        %1464 = vmatpush2.msra.mxu0 0.0
        %1465 = vmatprep.subr.mxu0 0.0
        %1466 = vmatpush2.msra.mxu0 0.0
        %1467 = vmatprep.mubr.f32.mxu0 0.0
        %1468 = vmatmul.mubr.f32.gmra.mxu0 %v1401
        %v1469 = vpop.f32.mrf.mxu0
        %v1470 = vadd.f32 %v432, %v1469
        %v1471 = vpop.f32.mrf.mxu0
        %1472 = vdwg.mxu0
        %v1474 = vsel %vm1180, %v1176, 0
        %1476 = vmatprep.subr.mxu0 0.0
        %1477 = vmatpush1.msra.mxu0 0.0
        %1478 = vmatprep.subr.mxu0 0.0
        %1479 = vmatpush1.msra.mxu0 0.0
        %1480 = vmatprep.subr.mxu0 0.0
        %1481 = vmatpush1.msra.mxu0 0.0
        %1482 = vmatprep.subr.mxu0 0.0
        %1483 = vmatpush1.msra.mxu0 0.0
        %1484 = vmatprep.subr.mxu0 0.0
        %1485 = vmatpush1.msra.mxu0 0.0
        %1486 = vmatprep.subr.mxu0 0.0
        %1487 = vmatpush1.msra.mxu0 0.0
        %1488 = vmatprep.subr.mxu0 0.0
        %1489 = vmatpush1.msra.mxu0 0.0
        %1490 = vmatprep.subr.mxu0 0.0
        %1491 = vmatpush1.msra.mxu0 0.0
        %1492 = vmatprep.subr.mxu0 0.0
        %1493 = vmatpush1.msra.mxu0 0.0
        %1494 = vmatprep.subr.mxu0 0.0
        %1495 = vmatpush1.msra.mxu0 0.0
        %1496 = vmatprep.subr.mxu0 0.0
        %1497 = vmatpush1.msra.mxu0 0.0
        %1498 = vmatprep.subr.mxu0 0.0
        %1499 = vmatpush1.msra.mxu0 0.0
        %1500 = vmatprep.subr.mxu0 0.0
        %1501 = vmatpush1.msra.mxu0 0.0
        %1502 = vmatprep.subr.mxu0 0.0
        %1503 = vmatpush1.msra.mxu0 0.0
        %1504 = vmatprep.subr.mxu0 0.0
        %1505 = vmatpush1.msra.mxu0 %v435
        %1506 = vmatprep.subr.mxu0 0.0
        %1507 = vmatpush1.msra.mxu0 %v434
        %1508 = vmatprep.subr.mxu0 0.0
        %1509 = vmatpush2.msra.mxu0 0.0
        %1510 = vmatprep.subr.mxu0 0.0
        %1511 = vmatpush2.msra.mxu0 0.0
        %1512 = vmatprep.subr.mxu0 0.0
        %1513 = vmatpush2.msra.mxu0 0.0
        %1514 = vmatprep.subr.mxu0 0.0
        %1515 = vmatpush2.msra.mxu0 0.0
        %1516 = vmatprep.subr.mxu0 0.0
        %1517 = vmatpush2.msra.mxu0 0.0
        %1518 = vmatprep.subr.mxu0 0.0
        %1519 = vmatpush2.msra.mxu0 0.0
        %1520 = vmatprep.subr.mxu0 0.0
        %1521 = vmatpush2.msra.mxu0 0.0
        %1522 = vmatprep.subr.mxu0 0.0
        %1523 = vmatpush2.msra.mxu0 0.0
        %1524 = vmatprep.subr.mxu0 0.0
        %1525 = vmatpush2.msra.mxu0 0.0
        %1526 = vmatprep.subr.mxu0 0.0
        %1527 = vmatpush2.msra.mxu0 0.0
        %1528 = vmatprep.subr.mxu0 0.0
        %1529 = vmatpush2.msra.mxu0 0.0
        %1530 = vmatprep.subr.mxu0 0.0
        %1531 = vmatpush2.msra.mxu0 0.0
        %1532 = vmatprep.subr.mxu0 0.0
        %1533 = vmatpush2.msra.mxu0 0.0
        %1534 = vmatprep.subr.mxu0 0.0
        %1535 = vmatpush2.msra.mxu0 0.0
        %1536 = vmatprep.subr.mxu0 0.0
        %1537 = vmatpush2.msra.mxu0 0.0
        %1538 = vmatprep.subr.mxu0 0.0
        %1539 = vmatpush2.msra.mxu0 0.0
        %1540 = vmatprep.mubr.f32.mxu0 0.0
        %1541 = vmatmul.mubr.f32.gmra.mxu0 %v1474
        %v1542 = vpop.f32.mrf.mxu0
        %v1543 = vadd.f32 %v434, %v1542
        %v1544 = vpop.f32.mrf.mxu0
        %1545 = vdwg.mxu0
        %v1547 = vsel %vm1180, %v1177, 0
        %1549 = vmatprep.subr.mxu0 0.0
        %1550 = vmatpush1.msra.mxu0 0.0
        %1551 = vmatprep.subr.mxu0 0.0
        %1552 = vmatpush1.msra.mxu0 0.0
        %1553 = vmatprep.subr.mxu0 0.0
        %1554 = vmatpush1.msra.mxu0 0.0
        %1555 = vmatprep.subr.mxu0 0.0
        %1556 = vmatpush1.msra.mxu0 0.0
        %1557 = vmatprep.subr.mxu0 0.0
        %1558 = vmatpush1.msra.mxu0 0.0
        %1559 = vmatprep.subr.mxu0 0.0
        %1560 = vmatpush1.msra.mxu0 0.0
        %1561 = vmatprep.subr.mxu0 0.0
        %1562 = vmatpush1.msra.mxu0 0.0
        %1563 = vmatprep.subr.mxu0 0.0
        %1564 = vmatpush1.msra.mxu0 0.0
        %1565 = vmatprep.subr.mxu0 0.0
        %1566 = vmatpush1.msra.mxu0 0.0
        %1567 = vmatprep.subr.mxu0 0.0
        %1568 = vmatpush1.msra.mxu0 0.0
        %1569 = vmatprep.subr.mxu0 0.0
        %1570 = vmatpush1.msra.mxu0 0.0
        %1571 = vmatprep.subr.mxu0 0.0
        %1572 = vmatpush1.msra.mxu0 0.0
        %1573 = vmatprep.subr.mxu0 0.0
        %1574 = vmatpush1.msra.mxu0 0.0
        %1575 = vmatprep.subr.mxu0 0.0
        %1576 = vmatpush1.msra.mxu0 0.0
        %1577 = vmatprep.subr.mxu0 0.0
        %1578 = vmatpush1.msra.mxu0 %v437
        %1579 = vmatprep.subr.mxu0 0.0
        %1580 = vmatpush1.msra.mxu0 %v436
        %1581 = vmatprep.subr.mxu0 0.0
        %1582 = vmatpush2.msra.mxu0 0.0
        %1583 = vmatprep.subr.mxu0 0.0
        %1584 = vmatpush2.msra.mxu0 0.0
        %1585 = vmatprep.subr.mxu0 0.0
        %1586 = vmatpush2.msra.mxu0 0.0
        %1587 = vmatprep.subr.mxu0 0.0
        %1588 = vmatpush2.msra.mxu0 0.0
        %1589 = vmatprep.subr.mxu0 0.0
        %1590 = vmatpush2.msra.mxu0 0.0
        %1591 = vmatprep.subr.mxu0 0.0
        %1592 = vmatpush2.msra.mxu0 0.0
        %1593 = vmatprep.subr.mxu0 0.0
        %1594 = vmatpush2.msra.mxu0 0.0
        %1595 = vmatprep.subr.mxu0 0.0
        %1596 = vmatpush2.msra.mxu0 0.0
        %1597 = vmatprep.subr.mxu0 0.0
        %1598 = vmatpush2.msra.mxu0 0.0
        %1599 = vmatprep.subr.mxu0 0.0
        %1600 = vmatpush2.msra.mxu0 0.0
        %1601 = vmatprep.subr.mxu0 0.0
        %1602 = vmatpush2.msra.mxu0 0.0
        %1603 = vmatprep.subr.mxu0 0.0
        %1604 = vmatpush2.msra.mxu0 0.0
        %1605 = vmatprep.subr.mxu0 0.0
        %1606 = vmatpush2.msra.mxu0 0.0
        %1607 = vmatprep.subr.mxu0 0.0
        %1608 = vmatpush2.msra.mxu0 0.0
        %1609 = vmatprep.subr.mxu0 0.0
        %1610 = vmatpush2.msra.mxu0 0.0
        %1611 = vmatprep.subr.mxu0 0.0
        %1612 = vmatpush2.msra.mxu0 0.0
        %1613 = vmatprep.mubr.f32.mxu0 0.0
        %1614 = vmatmul.mubr.f32.gmra.mxu0 %v1547
        %v1615 = vpop.f32.mrf.mxu0
        %v1616 = vadd.f32 %v436, %v1615
        %v1617 = vpop.f32.mrf.mxu0
        %1618 = vdwg.mxu0
        %v1620 = vsel %vm1180, %v1178, 0
        %1622 = vmatprep.subr.mxu0 0.0
        %1623 = vmatpush1.msra.mxu0 0.0
        %1624 = vmatprep.subr.mxu0 0.0
        %1625 = vmatpush1.msra.mxu0 0.0
        %1626 = vmatprep.subr.mxu0 0.0
        %1627 = vmatpush1.msra.mxu0 0.0
        %1628 = vmatprep.subr.mxu0 0.0
        %1629 = vmatpush1.msra.mxu0 0.0
        %1630 = vmatprep.subr.mxu0 0.0
        %1631 = vmatpush1.msra.mxu0 0.0
        %1632 = vmatprep.subr.mxu0 0.0
        %1633 = vmatpush1.msra.mxu0 0.0
        %1634 = vmatprep.subr.mxu0 0.0
        %1635 = vmatpush1.msra.mxu0 0.0
        %1636 = vmatprep.subr.mxu0 0.0
        %1637 = vmatpush1.msra.mxu0 0.0
        %1638 = vmatprep.subr.mxu0 0.0
        %1639 = vmatpush1.msra.mxu0 0.0
        %1640 = vmatprep.subr.mxu0 0.0
        %1641 = vmatpush1.msra.mxu0 0.0
        %1642 = vmatprep.subr.mxu0 0.0
        %1643 = vmatpush1.msra.mxu0 0.0
        %1644 = vmatprep.subr.mxu0 0.0
        %1645 = vmatpush1.msra.mxu0 0.0
        %1646 = vmatprep.subr.mxu0 0.0
        %1647 = vmatpush1.msra.mxu0 0.0
        %1648 = vmatprep.subr.mxu0 0.0
        %1649 = vmatpush1.msra.mxu0 0.0
        %1650 = vmatprep.subr.mxu0 0.0
        %1651 = vmatpush1.msra.mxu0 %v439
        %1652 = vmatprep.subr.mxu0 0.0
        %1653 = vmatpush1.msra.mxu0 %v438
        %1654 = vmatprep.subr.mxu0 0.0
        %1655 = vmatpush2.msra.mxu0 0.0
        %1656 = vmatprep.subr.mxu0 0.0
        %1657 = vmatpush2.msra.mxu0 0.0
        %1658 = vmatprep.subr.mxu0 0.0
        %1659 = vmatpush2.msra.mxu0 0.0
        %1660 = vmatprep.subr.mxu0 0.0
        %1661 = vmatpush2.msra.mxu0 0.0
        %1662 = vmatprep.subr.mxu0 0.0
        %1663 = vmatpush2.msra.mxu0 0.0
        %1664 = vmatprep.subr.mxu0 0.0
        %1665 = vmatpush2.msra.mxu0 0.0
        %1666 = vmatprep.subr.mxu0 0.0
        %1667 = vmatpush2.msra.mxu0 0.0
        %1668 = vmatprep.subr.mxu0 0.0
        %1669 = vmatpush2.msra.mxu0 0.0
        %1670 = vmatprep.subr.mxu0 0.0
        %1671 = vmatpush2.msra.mxu0 0.0
        %1672 = vmatprep.subr.mxu0 0.0
        %1673 = vmatpush2.msra.mxu0 0.0
        %1674 = vmatprep.subr.mxu0 0.0
        %1675 = vmatpush2.msra.mxu0 0.0
        %1676 = vmatprep.subr.mxu0 0.0
        %1677 = vmatpush2.msra.mxu0 0.0
        %1678 = vmatprep.subr.mxu0 0.0
        %1679 = vmatpush2.msra.mxu0 0.0
        %1680 = vmatprep.subr.mxu0 0.0
        %1681 = vmatpush2.msra.mxu0 0.0
        %1682 = vmatprep.subr.mxu0 0.0
        %1683 = vmatpush2.msra.mxu0 0.0
        %1684 = vmatprep.subr.mxu0 0.0
        %1685 = vmatpush2.msra.mxu0 0.0
        %1686 = vmatprep.mubr.f32.mxu0 0.0
        %1687 = vmatmul.mubr.f32.gmra.mxu0 %v1620
        %v1688 = vpop.f32.mrf.mxu0
        %v1689 = vadd.f32 %v438, %v1688
        %v1690 = vpop.f32.mrf.mxu0
        %1691 = vdwg.mxu0
        %v1693 = vsel %vm1180, %v1179, 0
        %1695 = vmatprep.subr.mxu0 0.0
        %1696 = vmatpush1.msra.mxu0 0.0
        %1697 = vmatprep.subr.mxu0 0.0
        %1698 = vmatpush1.msra.mxu0 0.0
        %1699 = vmatprep.subr.mxu0 0.0
        %1700 = vmatpush1.msra.mxu0 0.0
        %1701 = vmatprep.subr.mxu0 0.0
        %1702 = vmatpush1.msra.mxu0 0.0
        %1703 = vmatprep.subr.mxu0 0.0
        %1704 = vmatpush1.msra.mxu0 0.0
        %1705 = vmatprep.subr.mxu0 0.0
        %1706 = vmatpush1.msra.mxu0 0.0
        %1707 = vmatprep.subr.mxu0 0.0
        %1708 = vmatpush1.msra.mxu0 0.0
        %1709 = vmatprep.subr.mxu0 0.0
        %1710 = vmatpush1.msra.mxu0 0.0
        %1711 = vmatprep.subr.mxu0 0.0
        %1712 = vmatpush1.msra.mxu0 0.0
        %1713 = vmatprep.subr.mxu0 0.0
        %1714 = vmatpush1.msra.mxu0 0.0
        %1715 = vmatprep.subr.mxu0 0.0
        %1716 = vmatpush1.msra.mxu0 0.0
        %1717 = vmatprep.subr.mxu0 0.0
        %1718 = vmatpush1.msra.mxu0 0.0
        %1719 = vmatprep.subr.mxu0 0.0
        %1720 = vmatpush1.msra.mxu0 0.0
        %1721 = vmatprep.subr.mxu0 0.0
        %1722 = vmatpush1.msra.mxu0 0.0
        %1723 = vmatprep.subr.mxu0 0.0
        %1724 = vmatpush1.msra.mxu0 %v441
        %1725 = vmatprep.subr.mxu0 0.0
        %1726 = vmatpush1.msra.mxu0 %v440
        %1727 = vmatprep.subr.mxu0 0.0
        %1728 = vmatpush2.msra.mxu0 0.0
        %1729 = vmatprep.subr.mxu0 0.0
        %1730 = vmatpush2.msra.mxu0 0.0
        %1731 = vmatprep.subr.mxu0 0.0
        %1732 = vmatpush2.msra.mxu0 0.0
        %1733 = vmatprep.subr.mxu0 0.0
        %1734 = vmatpush2.msra.mxu0 0.0
        %1735 = vmatprep.subr.mxu0 0.0
        %1736 = vmatpush2.msra.mxu0 0.0
        %1737 = vmatprep.subr.mxu0 0.0
        %1738 = vmatpush2.msra.mxu0 0.0
        %1739 = vmatprep.subr.mxu0 0.0
        %1740 = vmatpush2.msra.mxu0 0.0
        %1741 = vmatprep.subr.mxu0 0.0
        %1742 = vmatpush2.msra.mxu0 0.0
        %1743 = vmatprep.subr.mxu0 0.0
        %1744 = vmatpush2.msra.mxu0 0.0
        %1745 = vmatprep.subr.mxu0 0.0
        %1746 = vmatpush2.msra.mxu0 0.0
        %1747 = vmatprep.subr.mxu0 0.0
        %1748 = vmatpush2.msra.mxu0 0.0
        %1749 = vmatprep.subr.mxu0 0.0
        %1750 = vmatpush2.msra.mxu0 0.0
        %1751 = vmatprep.subr.mxu0 0.0
        %1752 = vmatpush2.msra.mxu0 0.0
        %1753 = vmatprep.subr.mxu0 0.0
        %1754 = vmatpush2.msra.mxu0 0.0
        %1755 = vmatprep.subr.mxu0 0.0
        %1756 = vmatpush2.msra.mxu0 0.0
        %1757 = vmatprep.subr.mxu0 0.0
        %1758 = vmatpush2.msra.mxu0 0.0
        %1759 = vmatprep.mubr.f32.mxu0 0.0
        %1760 = vmatmul.mubr.f32.gmra.mxu0 %v1693
        %v1761 = vpop.f32.mrf.mxu0
        %v1762 = vadd.f32 %v440, %v1761
        %v1763 = vpop.f32.mrf.mxu0
        %1764 = vdwg.mxu0
        %vm1765 = vcmask 253952
        %1766 = vst.msk [vmem:[#allocation2] sm:$0x1] %vm1765, %v1251
        %1767 = vst.msk [vmem:[#allocation2 + $0x1] sm:$0x1] %vm1765, %v1324
        %1768 = vst.msk [vmem:[#allocation2 + $0x2] sm:$0x1] %vm1765, %v1397
        %1769 = vst.msk [vmem:[#allocation2 + $0x3] sm:$0x1] %vm1765, %v1470
        %1770 = vst.msk [vmem:[#allocation2 + $0x4] sm:$0x1] %vm1765, %v1543
        %1771 = vst.msk [vmem:[#allocation2 + $0x5] sm:$0x1] %vm1765, %v1616
        %1772 = vst.msk [vmem:[#allocation2 + $0x6] sm:$0x1] %vm1765, %v1689
        %1773 = vst.msk [vmem:[#allocation2 + $0x7] sm:$0x1] %vm1765, %v1762
        %v1774 = vld [vmem:[#allocation2] sm:$0xff]
        %v1775 = vsel %vm454, %v1774, 0.0
        %1776 = vadd.xlane.f32.xlu0 %v1775
        %v1777 = vpop.xlane.xlu0 %1776
        %v1778 = vrcp.pop 32.0
        %v1779 = vmul.f32 %v1777, %v1778
        %v1780 = vsub.f32 %v1774, %v1779
        %v1781 = vmul.f32 %v1780, %v1780
        %v1782 = vsel %vm454, %v1781, 0.0
        %1783 = vadd.xlane.f32.xlu0 %v1782
        %v1784 = vpop.xlane.xlu0 %1783
        %v1785 = vmul.f32 %v1784, %v1778
        %v1786 = vadd.f32 %v1785, 1e-05
        %v1787 = vrsqrt.pop %v1786
        %v1788 = vmul.f32 %v1780, %v1787
        %v1789 = vld [vmem:[%s4] sm:$0x1]
        %v1790 = vlaneseq
        %v1791 = vshrl.u32 %v1790, 7
        %v1792 = vsub.s32 0, %v1791
        %v1793 = vrot.slane %v1789, %v1792
        %v1794 = vmul.f32 %v1788, %v1793
        %v1795 = vld [vmem:[%s4 + $0x1] sm:$0x1]
        %v1796 = vlaneseq
        %v1797 = vshrl.u32 %v1796, 7
        %v1798 = vsub.s32 0, %v1797
        %v1799 = vrot.slane %v1795, %v1798
        %v1800 = vadd.f32 %v1794, %v1799
        %v1801 = vld [vmem:[#allocation10] sm:$0xff]
        %v1802 = vld [vmem:[#allocation10 + $0x8] sm:$0xff]
        %v1803 = vld [vmem:[#allocation10 + $0x10] sm:$0xff]
        %v1804 = vld [vmem:[#allocation10 + $0x18] sm:$0xff]
        %v1805 = vld [vmem:[%s4 + $0x2] sm:$0x1]
        %v1806 = vlaneseq
        %v1807 = vshrl.u32 %v1806, 7
        %v1808 = vsub.s32 0, %v1807
        %v1809 = vrot.slane %v1805, %v1808
        %v1811 = vsel %vm454, %v1800, 0
        %1813 = vmatprep.subr.mxu0 0.0
        %1814 = vmatpush1.msra.mxu0 0.0
        %1815 = vmatprep.subr.mxu0 0.0
        %1816 = vmatpush1.msra.mxu0 0.0
        %1817 = vmatprep.subr.mxu0 0.0
        %1818 = vmatpush1.msra.mxu0 0.0
        %1819 = vmatprep.subr.mxu0 0.0
        %1820 = vmatpush1.msra.mxu0 0.0
        %1821 = vmatprep.subr.mxu0 0.0
        %1822 = vmatpush1.msra.mxu0 0.0
        %1823 = vmatprep.subr.mxu0 0.0
        %1824 = vmatpush1.msra.mxu0 0.0
        %1825 = vmatprep.subr.mxu0 0.0
        %1826 = vmatpush1.msra.mxu0 0.0
        %1827 = vmatprep.subr.mxu0 0.0
        %1828 = vmatpush1.msra.mxu0 0.0
        %1829 = vmatprep.subr.mxu0 0.0
        %1830 = vmatpush1.msra.mxu0 0.0
        %1831 = vmatprep.subr.mxu0 0.0
        %1832 = vmatpush1.msra.mxu0 0.0
        %1833 = vmatprep.subr.mxu0 0.0
        %1834 = vmatpush1.msra.mxu0 0.0
        %1835 = vmatprep.subr.mxu0 0.0
        %1836 = vmatpush1.msra.mxu0 0.0
        %1837 = vmatprep.subr.mxu0 0.0
        %1838 = vmatpush1.msra.mxu0 %v1804
        %1839 = vmatprep.subr.mxu0 0.0
        %1840 = vmatpush1.msra.mxu0 %v1803
        %1841 = vmatprep.subr.mxu0 0.0
        %1842 = vmatpush1.msra.mxu0 %v1802
        %1843 = vmatprep.subr.mxu0 0.0
        %1844 = vmatpush1.msra.mxu0 %v1801
        %1845 = vmatprep.subr.mxu0 0.0
        %1846 = vmatpush2.msra.mxu0 0.0
        %1847 = vmatprep.subr.mxu0 0.0
        %1848 = vmatpush2.msra.mxu0 0.0
        %1849 = vmatprep.subr.mxu0 0.0
        %1850 = vmatpush2.msra.mxu0 0.0
        %1851 = vmatprep.subr.mxu0 0.0
        %1852 = vmatpush2.msra.mxu0 0.0
        %1853 = vmatprep.subr.mxu0 0.0
        %1854 = vmatpush2.msra.mxu0 0.0
        %1855 = vmatprep.subr.mxu0 0.0
        %1856 = vmatpush2.msra.mxu0 0.0
        %1857 = vmatprep.subr.mxu0 0.0
        %1858 = vmatpush2.msra.mxu0 0.0
        %1859 = vmatprep.subr.mxu0 0.0
        %1860 = vmatpush2.msra.mxu0 0.0
        %1861 = vmatprep.subr.mxu0 0.0
        %1862 = vmatpush2.msra.mxu0 0.0
        %1863 = vmatprep.subr.mxu0 0.0
        %1864 = vmatpush2.msra.mxu0 0.0
        %1865 = vmatprep.subr.mxu0 0.0
        %1866 = vmatpush2.msra.mxu0 0.0
        %1867 = vmatprep.subr.mxu0 0.0
        %1868 = vmatpush2.msra.mxu0 0.0
        %1869 = vmatprep.subr.mxu0 0.0
        %1870 = vmatpush2.msra.mxu0 0.0
        %1871 = vmatprep.subr.mxu0 0.0
        %1872 = vmatpush2.msra.mxu0 0.0
        %1873 = vmatprep.subr.mxu0 0.0
        %1874 = vmatpush2.msra.mxu0 0.0
        %1875 = vmatprep.subr.mxu0 0.0
        %1876 = vmatpush2.msra.mxu0 0.0
        %1877 = vmatprep.mubr.f32.mxu0 0.0
        %1878 = vmatmul.mubr.f32.gmra.mxu0 %v1811
        %v1879 = vpop.f32.mrf.mxu0
        %v1880 = vadd.f32 %v1809, %v1879
        %v1881 = vpop.f32.mrf.mxu0
        %1882 = vdwg.mxu0
        %v1883 = vmul.f32 %v1880, 0.5
        %v1884 = vmul.f32 %v1880, 0.70710677
        %v1885 = verf.f32.pop %v1884
        %v1886 = vadd.f32 %v1885, 1.0
        %v1887 = vmul.f32 %v1883, %v1886
        %v1888 = vld [vmem:[#allocation11] sm:$0xff]
        %v1889 = vld [vmem:[#allocation11 + $0x8] sm:$0xff]
        %v1890 = vld [vmem:[#allocation11 + $0x10] sm:$0xff]
        %v1891 = vld [vmem:[#allocation11 + $0x18] sm:$0xff]
        %v1892 = vld [vmem:[%s7] sm:$0x1]
        %v1894 = vlaneseq
        %v1895 = vshrl.u32 %v1894, 7
        %v1896 = vsub.s32 0, %v1895
        %v1897 = vrot.slane %v1892, %v1896
        %v1900 = vsel %vm454, %v1887, 0
        %1902 = vmatprep.subr.mxu0 0.0
        %1903 = vmatpush1.msra.mxu0 0.0
        %1904 = vmatprep.subr.mxu0 0.0
        %1905 = vmatpush1.msra.mxu0 0.0
        %1906 = vmatprep.subr.mxu0 0.0
        %1907 = vmatpush1.msra.mxu0 0.0
        %1908 = vmatprep.subr.mxu0 0.0
        %1909 = vmatpush1.msra.mxu0 0.0
        %1910 = vmatprep.subr.mxu0 0.0
        %1911 = vmatpush1.msra.mxu0 0.0
        %1912 = vmatprep.subr.mxu0 0.0
        %1913 = vmatpush1.msra.mxu0 0.0
        %1914 = vmatprep.subr.mxu0 0.0
        %1915 = vmatpush1.msra.mxu0 0.0
        %1916 = vmatprep.subr.mxu0 0.0
        %1917 = vmatpush1.msra.mxu0 0.0
        %1918 = vmatprep.subr.mxu0 0.0
        %1919 = vmatpush1.msra.mxu0 0.0
        %1920 = vmatprep.subr.mxu0 0.0
        %1921 = vmatpush1.msra.mxu0 0.0
        %1922 = vmatprep.subr.mxu0 0.0
        %1923 = vmatpush1.msra.mxu0 0.0
        %1924 = vmatprep.subr.mxu0 0.0
        %1925 = vmatpush1.msra.mxu0 0.0
        %1926 = vmatprep.subr.mxu0 0.0
        %1927 = vmatpush1.msra.mxu0 %v1891
        %1928 = vmatprep.subr.mxu0 0.0
        %1929 = vmatpush1.msra.mxu0 %v1890
        %1930 = vmatprep.subr.mxu0 0.0
        %1931 = vmatpush1.msra.mxu0 %v1889
        %1932 = vmatprep.subr.mxu0 0.0
        %1933 = vmatpush1.msra.mxu0 %v1888
        %1934 = vmatprep.subr.mxu0 0.0
        %1935 = vmatpush2.msra.mxu0 0.0
        %1936 = vmatprep.subr.mxu0 0.0
        %1937 = vmatpush2.msra.mxu0 0.0
        %1938 = vmatprep.subr.mxu0 0.0
        %1939 = vmatpush2.msra.mxu0 0.0
        %1940 = vmatprep.subr.mxu0 0.0
        %1941 = vmatpush2.msra.mxu0 0.0
        %1942 = vmatprep.subr.mxu0 0.0
        %1943 = vmatpush2.msra.mxu0 0.0
        %1944 = vmatprep.subr.mxu0 0.0
        %1945 = vmatpush2.msra.mxu0 0.0
        %1946 = vmatprep.subr.mxu0 0.0
        %1947 = vmatpush2.msra.mxu0 0.0
        %1948 = vmatprep.subr.mxu0 0.0
        %1949 = vmatpush2.msra.mxu0 0.0
        %1950 = vmatprep.subr.mxu0 0.0
        %1951 = vmatpush2.msra.mxu0 0.0
        %1952 = vmatprep.subr.mxu0 0.0
        %1953 = vmatpush2.msra.mxu0 0.0
        %1954 = vmatprep.subr.mxu0 0.0
        %1955 = vmatpush2.msra.mxu0 0.0
        %1956 = vmatprep.subr.mxu0 0.0
        %1957 = vmatpush2.msra.mxu0 0.0
        %1958 = vmatprep.subr.mxu0 0.0
        %1959 = vmatpush2.msra.mxu0 0.0
        %1960 = vmatprep.subr.mxu0 0.0
        %1961 = vmatpush2.msra.mxu0 0.0
        %1962 = vmatprep.subr.mxu0 0.0
        %1963 = vmatpush2.msra.mxu0 0.0
        %1964 = vmatprep.subr.mxu0 0.0
        %1965 = vmatpush2.msra.mxu0 0.0
        %1966 = vmatprep.mubr.f32.mxu0 0.0
        %1967 = vmatmul.mubr.f32.gmra.mxu0 %v1900
        %v1968 = vpop.f32.mrf.mxu0
        %v1969 = vadd.f32 %v1897, %v1968
        %v1970 = vpop.f32.mrf.mxu0
        %1971 = vdwg.mxu0
        %1972 = vst [vmem:[%s407] sm:$0xff] %v1969
        %s1973 = sand.u32 %s216, 1
        %s1974 = scalar_lea.sflag [#allocation5], %s1973
        %s1975 = sand.u32 %s216, 1
        %s1976 = smul.addr %s1975, 8
        %s1977 = scalar_lea.vmem [#allocation13], %s1976
        // Predicated region
        $region73: #{tpu_custom_call.1} parent=51 // pred_check
          %p1978 = pneg %p226
        $region74: #{tpu_custom_call.1} parent=51 // pred_check_branch
          %1980 = sbr.rel (%p1978) target = $region76
        $region75: #{tpu_custom_call.1} parent=51 // pred_region
          %s1982 = ssub.s32 128, 128
          %1983 = vsyncadd %s1974, %s1982
          %s1984 = smul.addr %s30, 128
          %s1985 = scalar_lea.hbm %s8, %s1984
          %s1987 = sshll.u32 %s1977, 4
          %s1988 = int_to_ptr.vmem [resolvable:$true] %s1987
          %1990 = dma.vmem_to_hbm [thread:$0]  %s1988, 128, %s1985, %s1974
        $region76: #{tpu_custom_call.1} parent=51 // pred_fallthru
          _
      $region52: #{tpu_custom_call.1} parent=5 // pred_fallthru
        _
      %p1991 = scmp.le.s32.totalorder 2, %s25
      // Predicated region
      $region77: #{tpu_custom_call.1} parent=5 // pred_check
        %p1992 = pneg %p1991
      $region78: #{tpu_custom_call.1} parent=5 // pred_check_branch
        %1994 = sbr.rel (%p1992) target = $region80
      $region79: #{tpu_custom_call.1} parent=5 // pred_region
        %s1995 = ssub.s32 %s25, 2
        // Predicated region
        $region81: #{tpu_custom_call.1} parent=79 // pred_check
          %p1996 = pneg %p232
        $region82: #{tpu_custom_call.1} parent=79 // pred_check_branch
          %1998 = sbr.rel (%p1996) target = $region84
        $region83: #{tpu_custom_call.1} parent=79 // pred_region
          %s1999 = sand.u32 %s217, 1
          %s2000 = scalar_lea.sflag [#allocation5], %s1999
          %s2001 = sand.u32 %s217, 1
          %s2002 = smul.addr %s2001, 8
          %s2003 = scalar_lea.vmem [#allocation13], %s2002
          %2004 = dma.done %s2000, 128
        $region84: #{tpu_custom_call.1} parent=79 // pred_fallthru
          _
      $region80: #{tpu_custom_call.1} parent=5 // pred_fallthru
        _
    $region6: #{tpu_custom_call.1} parent=1 // loop_footer
      %s29 = sadd.s32 1, %s25
    $region7: #{tpu_custom_call.1} parent=1 // loop_footer_branch
      %24 = sbr.rel target = $region3
    $region8: #{tpu_custom_call.1} parent=1 // loop_exit
      _
    %2005 = vsyncpa [#allocation4], 1
    %s2006 = scalar_lea.sflag [#allocation4], 1
    %2007 = vsyncpa %s2006, 1
    %2008 = vsyncpa [#allocation8], 1
    %s2009 = scalar_lea.sflag [#allocation8], 1
    %2010 = vsyncpa %s2009, 1
    %2011 = vsyncpa [#allocation12], 1
    %2012 = vsyncpa [#allocation5], 1
    %s2013 = scalar_lea.sflag [#allocation5], 1
    %2014 = vsyncpa %s2013, 1
    %2015 = vsyncpa [#allocation6], 1
    %s2016 = scalar_lea.sflag [#allocation6], 1
    %2017 = vsyncpa %s2016, 1

</llo_original>
